<compile_context>
chip_gen: v7x
topology: tpu7x:2x2x1
jax: 0.10.0
libtpu: 0.0.40
codegen_flags: <defaults>
</compile_context>

<pallas_src>
import functools

import jax
import jax.numpy as jnp
from jax.experimental import pallas as pl
from jax.experimental.pallas import tpu as pltpu


HP = 128  # GRU hidden size padded to one full 128-lane tile (per gate)


def _align8(n):
    return ((n + 7) // 8) * 8


def _nan_to_num(x):
    # torch.nan_to_num semantics: nan -> 0, +inf -> max finite, -inf -> min finite.
    fin = jnp.finfo(jnp.float32)
    x = jnp.where(jnp.isnan(x), jnp.zeros_like(x), x)
    return jnp.clip(x, fin.min, fin.max)


# ----------------------- packed-parameter layout ------------------------------


def _param_layout(n_feat, d1, h, d2, d3, d4, d5):
    """Static row offsets (8-aligned) inside the two packed parameter buffers."""
    la = {}
    r = 0
    la["wi"] = r;  r = _align8(r + d1)     # (D1, 3*HP) fused input projection
    la["bi"] = r;  r = _align8(r + 1)      # (1, 3*HP)  b_i + b_h (r,z), b_in (n)
    la["wh"] = r;  r = _align8(r + HP)     # (HP, 3*HP) fused recurrent projection
    la["bhn"] = r; r = _align8(r + 1)      # (1, HP)    hidden-side n bias
    la["rows"] = r

    lb = {}
    r = 0
    for name, rows in (("d1w", n_feat), ("d1b", 1), ("d2w", h), ("d2b", 1),
                       ("d3w", d2), ("d3b", 1), ("d4w", d3), ("d4b", 1),
                       ("d5w", d4), ("d5b", 1), ("fcw", d5), ("fcb", 1)):
        lb[name] = r
        r = _align8(r + rows)
    lb["rows"] = r
    return la, lb


# ----------------------------- fused Pallas kernel ----------------------------


def _fused_forward_kernel(x_ref, pa_ref, pb_ref, o_ref, *,
                          batch, seq, n_feat, d1, h, d2, d3, d4, d5, la, lb):
    f32 = jnp.float32
    hp = HP
    dot = lambda a, b: jnp.dot(a, b, preferred_element_type=f32)

    # ---- packed parameter views (static, sublane/lane-aligned ref slices) ----
    d1w = pb_ref[lb["d1w"]:lb["d1w"] + n_feat, :d1]
    d1b = pb_ref[lb["d1b"]:lb["d1b"] + 1, :d1]
    wi = pa_ref[la["wi"]:la["wi"] + d1, :]            # (D1, 3*HP)
    bi = pa_ref[la["bi"]:la["bi"] + 1, :]             # (1, 3*HP)
    wh = pa_ref[la["wh"]:la["wh"] + hp, :]            # (HP, 3*HP)
    bhn = pa_ref[la["bhn"]:la["bhn"] + 1, :hp]        # (1, HP)

    # ---- nan_to_num + dense1(tanh) + hoisted GRU input projection -----------
    # Per-batch slabs (ref leading-index loads); all off the serial path.
    xps = []
    for b in range(batch):
        xb = _nan_to_num(x_ref[b].astype(f32))        # (S, F)
        h1 = jnp.tanh(dot(xb, d1w) + d1b)             # (S, D1)
        xps.append(dot(h1, wi) + bi)                  # (S, 3*HP), biases folded

    bhn_b = jnp.broadcast_to(bhn, (batch, hp))        # hoisted out of the loop

    # ---- GRU recurrence, fully unrolled (seq is tiny & static) --------------
    # Gate g of {r,z,n} lives in lanes [g*HP, (g+1)*HP): all slices vreg-aligned.
    hstate = jnp.zeros((batch, hp), f32)
    for t in range(seq):
        xp_t = jnp.concatenate([xp[t:t + 1, :] for xp in xps], axis=0)  # (B,3HP)
        hp_all = dot(hstate, wh)                                        # (B,3HP)
        rz = jax.nn.sigmoid(xp_t[:, :2 * hp] + hp_all[:, :2 * hp])      # 1 EUP op
        r = rz[:, :hp]
        z = rz[:, hp:]
        n = jnp.tanh(xp_t[:, 2 * hp:] + r * (hp_all[:, 2 * hp:] + bhn_b))
        hstate = (1.0 - z) * n + z * hstate

    # ---- MLP head on last hidden state (dropout = identity in eval) ---------
    def dense_relu(v, w_off, k, b_off, n_out):
        w = pb_ref[w_off:w_off + k, :n_out]
        bb = pb_ref[b_off:b_off + 1, :n_out]
        return jnp.maximum(dot(v, w) + bb, 0.0)

    out = dense_relu(hstate[:, :h], lb["d2w"], h, lb["d2b"], d2)  # padded lanes are 0
    out = dense_relu(out, lb["d3w"], d2, lb["d3b"], d3)
    out = dense_relu(out, lb["d4w"], d3, lb["d4b"], d4)
    out = dense_relu(out, lb["d5w"], d4, lb["d5b"], d5)
    fcw = pb_ref[lb["fcw"]:lb["fcw"] + d5, :1]
    fcb = pb_ref[lb["fcb"]:lb["fcb"] + 1, :1]
    o_ref[...] = jax.nn.sigmoid(dot(out, fcw) + fcb).astype(o_ref.dtype)


# ------------------------------ model wrapper ---------------------------------


def make_forward(n_feat, d1, h, d2, d3, d4, d5):
    """Returns forward(x, buf_a, buf_b) -> (batch, 1); a single pallas_call."""
    la, lb = _param_layout(n_feat, d1, h, d2, d3, d4, d5)

    @jax.jit
    def forward(x, buf_a, buf_b):
        b, s, f = x.shape
        kernel = functools.partial(
            _fused_forward_kernel, batch=b, seq=s, n_feat=f,
            d1=d1, h=h, d2=d2, d3=d3, d4=d4, d5=d5, la=la, lb=lb)
        return pl.pallas_call(
            kernel,
            out_shape=jax.ShapeDtypeStruct((b, 1), jnp.float32),
            compiler_params=pltpu.CompilerParams(
                vmem_limit_bytes=8 * 1024 * 1024),
        )(x, buf_a, buf_b)

    return forward


# ------------------------------- parameters -----------------------------------


def init_params(key, n_feat, d1, gru_h, d2, d3, d4, d5):
    def lin(k, fan_in, fan_out):
        k1, k2 = jax.random.split(k)
        bound = 1.0 / jnp.sqrt(fan_in)
        w = jax.random.uniform(k1, (fan_in, fan_out), jnp.float32, -bound, bound)
        b = jax.random.uniform(k2, (fan_out,), jnp.float32, -bound, bound)
        return w, b

    keys = jax.random.split(key, 8)
    p = {}
    p["d1_w"], p["d1_b"] = lin(keys[0], n_feat, d1)

    # GRU params (PyTorch gate order r, z, n), stored pre-transposed (in, out).
    bound = 1.0 / jnp.sqrt(gru_h)
    gk = jax.random.split(keys[1], 8)
    u = lambda k, shape: jax.random.uniform(k, shape, jnp.float32, -bound, bound)
    p["w_ir"], p["w_iz"], p["w_in"] = (u(gk[0], (d1, gru_h)),
                                       u(gk[1], (d1, gru_h)),
                                       u(gk[2], (d1, gru_h)))
    p["w_hr"], p["w_hz"], p["w_hn"] = (u(gk[3], (gru_h, gru_h)),
                                       u(gk[4], (gru_h, gru_h)),
                                       u(gk[5], (gru_h, gru_h)))
    b_i, b_h = u(gk[6], (3, gru_h)), u(gk[7], (3, gru_h))
    p["b_r"], p["b_z"] = b_i[0] + b_h[0], b_i[1] + b_h[1]
    p["b_in"], p["b_hn"] = b_i[2], b_h[2]

    p["d2_w"], p["d2_b"] = lin(keys[2], gru_h, d2)
    p["d3_w"], p["d3_b"] = lin(keys[3], d2, d3)
    p["d4_w"], p["d4_b"] = lin(keys[4], d3, d4)
    p["d5_w"], p["d5_b"] = lin(keys[5], d4, d5)
    p["fc_w"], p["fc_b"] = lin(keys[6], d5, 1)
    return p


def pack_params(p, n_feat, d1, h, d2, d3, d4, d5):
    """Pack all weights/biases into two lane-padded f32 buffers (2 DMAs total).

    Buffer A (width 3*HP): GRU input projection + bias, recurrent projection,
    hidden n-bias; gate g occupies lanes [g*HP, g*HP + h), zeros elsewhere.
    Buffer B (width 128): all dense/fc weights and biases, column-0 anchored.
    """
    la, lb = _param_layout(n_feat, d1, h, d2, d3, d4, d5)

    buf_a = jnp.zeros((la["rows"], 3 * HP), jnp.float32)
    gates_in = ((p["w_ir"], p["b_r"]), (p["w_iz"], p["b_z"]), (p["w_in"], p["b_in"]))
    for g, (w, b) in enumerate(gates_in):
        buf_a = buf_a.at[la["wi"]:la["wi"] + d1, g * HP:g * HP + h].set(w)
        buf_a = buf_a.at[la["bi"], g * HP:g * HP + h].set(b)
    for g, w in enumerate((p["w_hr"], p["w_hz"], p["w_hn"])):
        buf_a = buf_a.at[la["wh"]:la["wh"] + h, g * HP:g * HP + h].set(w)
    buf_a = buf_a.at[la["bhn"], :h].set(p["b_hn"])

    buf_b = jnp.zeros((lb["rows"], 128), jnp.float32)

    def put(buf, off, w):
        w2 = w.reshape(1, -1) if w.ndim == 1 else w
        return buf.at[off:off + w2.shape[0], :w2.shape[1]].set(w2)

    buf_b = put(buf_b, lb["d1w"], p["d1_w"]); buf_b = put(buf_b, lb["d1b"], p["d1_b"])
    buf_b = put(buf_b, lb["d2w"], p["d2_w"]); buf_b = put(buf_b, lb["d2b"], p["d2_b"])
    buf_b = put(buf_b, lb["d3w"], p["d3_w"]); buf_b = put(buf_b, lb["d3b"], p["d3_b"])
    buf_b = put(buf_b, lb["d4w"], p["d4_w"]); buf_b = put(buf_b, lb["d4b"], p["d4_b"])
    buf_b = put(buf_b, lb["d5w"], p["d5_w"]); buf_b = put(buf_b, lb["d5b"], p["d5_b"])
    buf_b = put(buf_b, lb["fcw"], p["fc_w"]); buf_b = put(buf_b, lb["fcb"], p["fc_b"])
    return buf_a, buf_b


# ------------------------------ reference (JAX) --------------------------------


def reference_forward(x, p):
    out = jnp.nan_to_num(x)
    out = jnp.tanh(out @ p["d1_w"] + p["d1_b"])
    b, s, _ = out.shape
    h = jnp.zeros((b, p["w_hr"].shape[0]), jnp.float32)
    for t in range(s):
        xt = out[:, t]
        r = jax.nn.sigmoid(xt @ p["w_ir"] + h @ p["w_hr"] + p["b_r"])
        z = jax.nn.sigmoid(xt @ p["w_iz"] + h @ p["w_hz"] + p["b_z"])
        n = jnp.tanh(xt @ p["w_in"] + p["b_in"] + r * (h @ p["w_hn"] + p["b_hn"]))
        h = (1.0 - z) * n + z * h
    out = jax.nn.relu(h @ p["d2_w"] + p["d2_b"])
    out = jax.nn.relu(out @ p["d3_w"] + p["d3_b"])
    out = jax.nn.relu(out @ p["d4_w"] + p["d4_b"])
    out = jax.nn.relu(out @ p["d5_w"] + p["d5_b"])
    return jax.nn.sigmoid(out @ p["fc_w"] + p["fc_b"])


# ---------------------------------- main ----------------------------------------


if __name__ == "__main__":
    batch, seq, n_feat = 2, 8, 4
    d1, gru_h, d2, d3, d4, d5 = 16, 32, 32, 16, 16, 8

    key = jax.random.PRNGKey(0)
    kx, kp = jax.random.split(key)
    x = jax.random.normal(kx, (batch, seq, n_feat), jnp.float32)
    x = x.at[0, 0, 0].set(jnp.nan)    # exercise nan_to_num: nan -> 0
    x = x.at[1, 3, 2].set(jnp.inf)    # exercise nan_to_num: +inf -> max finite
    x = x.at[1, 5, 1].set(-jnp.inf)   # exercise nan_to_num: -inf -> min finite

    params = init_params(kp, n_feat, d1, gru_h, d2, d3, d4, d5)
    buf_a, buf_b = pack_params(params, n_feat, d1, gru_h, d2, d3, d4, d5)

    fwd = make_forward(n_feat, d1, gru_h, d2, d3, d4, d5)
    out = jax.block_until_ready(fwd(x, buf_a, buf_b))

    ref = reference_forward(x, params)
    assert out.shape == (batch, 1)
    assert jnp.allclose(out, ref, atol=1e-5, rtol=1e-5), (out, ref)
    print("KERNEL_OK")
</pallas_src>

<mosaic_0001>
module attributes {stable_mosaic.version = 11 : i64} {
  func.func @_fused_forward_kernel(%arg0: memref<2x8x4xf32, #tpu.memory_space<vmem>>, %arg1: memref<160x384xf32, #tpu.memory_space<vmem>>, %arg2: memref<160x128xf32, #tpu.memory_space<vmem>>, %arg3: memref<2x1xf32, #tpu.memory_space<vmem>>) attributes {dimension_semantics = [], scalar_prefetch = 0 : i64, scratch_operands = 0 : i64, tpu.core_type = #tpu.core_type<tc>} {
    %c0 = arith.constant 0 : index
    %c0_0 = arith.constant 0 : index
    %0 = vector.load %arg2[%c0, %c0_0] : memref<160x128xf32, #tpu.memory_space<vmem>>, vector<4x16xf32>
    %c8 = arith.constant 8 : index
    %c0_1 = arith.constant 0 : index
    %1 = vector.load %arg2[%c8, %c0_1] : memref<160x128xf32, #tpu.memory_space<vmem>>, vector<1x16xf32>
    %c0_2 = arith.constant 0 : index
    %c0_3 = arith.constant 0 : index
    %2 = vector.load %arg1[%c0_2, %c0_3] : memref<160x384xf32, #tpu.memory_space<vmem>>, vector<16x384xf32>
    %c16 = arith.constant 16 : index
    %c0_4 = arith.constant 0 : index
    %3 = vector.load %arg1[%c16, %c0_4] : memref<160x384xf32, #tpu.memory_space<vmem>>, vector<1x384xf32>
    %c24 = arith.constant 24 : index
    %c0_5 = arith.constant 0 : index
    %4 = vector.load %arg1[%c24, %c0_5] : memref<160x384xf32, #tpu.memory_space<vmem>>, vector<128x384xf32>
    %c152 = arith.constant 152 : index
    %c0_6 = arith.constant 0 : index
    %5 = vector.load %arg1[%c152, %c0_6] : memref<160x384xf32, #tpu.memory_space<vmem>>, vector<1x128xf32>
    %c0_7 = arith.constant 0 : index
    %c0_8 = arith.constant 0 : index
    %c0_9 = arith.constant 0 : index
    %6 = vector.load %arg0[%c0_7, %c0_8, %c0_9] : memref<2x8x4xf32, #tpu.memory_space<vmem>>, vector<1x8x4xf32>
    %7 = vector.shape_cast %6 : vector<1x8x4xf32> to vector<8x4xf32>
    %8 = arith.cmpf one, %7, %7 : vector<8x4xf32>
    %cst = arith.constant 0.000000e+00 : f32
    %9 = vector.broadcast %cst : f32 to vector<8x4xf32>
    %10 = arith.select %8, %9, %7 : vector<8x4xi1>, vector<8x4xf32>
    %cst_10 = arith.constant -3.40282347E+38 : f32
    %cst_11 = arith.constant 3.40282347E+38 : f32
    %11 = vector.broadcast %cst_10 : f32 to vector<8x4xf32>
    %12 = arith.maximumf %11, %10 : vector<8x4xf32>
    %13 = vector.broadcast %cst_11 : f32 to vector<8x4xf32>
    %14 = arith.minimumf %13, %12 : vector<8x4xf32>
    %cst_12 = arith.constant dense<0.000000e+00> : vector<8x16xf32>
    %15 = tpu.matmul %14, %0, %cst_12 {dimension_numbers = #tpu.dot_dimension_numbers<[1], [0], [0], [1], [0, 0, 1, 1], [], []>} : vector<8x4xf32>, vector<4x16xf32>, vector<8x16xf32> -> vector<8x16xf32>
    %16 = vector.broadcast %1 : vector<1x16xf32> to vector<8x16xf32>
    %17 = arith.addf %15, %16 : vector<8x16xf32>
    %18 = math.tanh %17 : vector<8x16xf32>
    %cst_13 = arith.constant dense<0.000000e+00> : vector<8x384xf32>
    %19 = tpu.matmul %18, %2, %cst_13 {dimension_numbers = #tpu.dot_dimension_numbers<[1], [0], [0], [1], [0, 0, 1, 1], [], []>} : vector<8x16xf32>, vector<16x384xf32>, vector<8x384xf32> -> vector<8x384xf32>
    %20 = vector.broadcast %3 : vector<1x384xf32> to vector<8x384xf32>
    %21 = arith.addf %19, %20 : vector<8x384xf32>
    %c1 = arith.constant 1 : index
    %c0_14 = arith.constant 0 : index
    %c0_15 = arith.constant 0 : index
    %22 = vector.load %arg0[%c1, %c0_14, %c0_15] : memref<2x8x4xf32, #tpu.memory_space<vmem>>, vector<1x8x4xf32>
    %23 = vector.shape_cast %22 : vector<1x8x4xf32> to vector<8x4xf32>
    %24 = arith.cmpf one, %23, %23 : vector<8x4xf32>
    %cst_16 = arith.constant 0.000000e+00 : f32
    %25 = vector.broadcast %cst_16 : f32 to vector<8x4xf32>
    %26 = arith.select %24, %25, %23 : vector<8x4xi1>, vector<8x4xf32>
    %cst_17 = arith.constant -3.40282347E+38 : f32
    %cst_18 = arith.constant 3.40282347E+38 : f32
    %27 = vector.broadcast %cst_17 : f32 to vector<8x4xf32>
    %28 = arith.maximumf %27, %26 : vector<8x4xf32>
    %29 = vector.broadcast %cst_18 : f32 to vector<8x4xf32>
    %30 = arith.minimumf %29, %28 : vector<8x4xf32>
    %cst_19 = arith.constant dense<0.000000e+00> : vector<8x16xf32>
    %31 = tpu.matmul %30, %0, %cst_19 {dimension_numbers = #tpu.dot_dimension_numbers<[1], [0], [0], [1], [0, 0, 1, 1], [], []>} : vector<8x4xf32>, vector<4x16xf32>, vector<8x16xf32> -> vector<8x16xf32>
    %32 = vector.broadcast %1 : vector<1x16xf32> to vector<8x16xf32>
    %33 = arith.addf %31, %32 : vector<8x16xf32>
    %34 = math.tanh %33 : vector<8x16xf32>
    %cst_20 = arith.constant dense<0.000000e+00> : vector<8x384xf32>
    %35 = tpu.matmul %34, %2, %cst_20 {dimension_numbers = #tpu.dot_dimension_numbers<[1], [0], [0], [1], [0, 0, 1, 1], [], []>} : vector<8x16xf32>, vector<16x384xf32>, vector<8x384xf32> -> vector<8x384xf32>
    %36 = vector.broadcast %3 : vector<1x384xf32> to vector<8x384xf32>
    %37 = arith.addf %35, %36 : vector<8x384xf32>
    %38 = vector.shape_cast %5 : vector<1x128xf32> to vector<1x128xf32>
    %39 = vector.broadcast %38 : vector<1x128xf32> to vector<2x128xf32>
    %cst_21 = arith.constant 0.000000e+00 : f32
    %40 = vector.broadcast %cst_21 : f32 to vector<2x128xf32>
    %41 = vector.extract_strided_slice %21 {offsets = [0, 0], sizes = [1, 384], strides = [1, 1]} : vector<8x384xf32> to vector<1x384xf32>
    %42 = vector.extract_strided_slice %37 {offsets = [0, 0], sizes = [1, 384], strides = [1, 1]} : vector<8x384xf32> to vector<1x384xf32>
    %43 = tpu.concatenate %41, %42 in 0 : vector<1x384xf32>, vector<1x384xf32> -> vector<2x384xf32>
    %cst_22 = arith.constant dense<0.000000e+00> : vector<2x384xf32>
    %44 = tpu.matmul %40, %4, %cst_22 {dimension_numbers = #tpu.dot_dimension_numbers<[1], [0], [0], [1], [0, 0, 1, 1], [], []>} : vector<2x128xf32>, vector<128x384xf32>, vector<2x384xf32> -> vector<2x384xf32>
    %45 = vector.extract_strided_slice %43 {offsets = [0, 0], sizes = [2, 256], strides = [1, 1]} : vector<2x384xf32> to vector<2x256xf32>
    %46 = vector.extract_strided_slice %44 {offsets = [0, 0], sizes = [2, 256], strides = [1, 1]} : vector<2x384xf32> to vector<2x256xf32>
    %47 = arith.addf %45, %46 : vector<2x256xf32>
    %48 = arith.negf %47 : vector<2x256xf32>
    %49 = math.exp %48 : vector<2x256xf32>
    %cst_23 = arith.constant 1.000000e+00 : f32
    %50 = vector.broadcast %cst_23 : f32 to vector<2x256xf32>
    %51 = arith.addf %50, %49 : vector<2x256xf32>
    %52 = arith.divf %50, %51 : vector<2x256xf32>
    %53 = vector.extract_strided_slice %52 {offsets = [0, 0], sizes = [2, 128], strides = [1, 1]} : vector<2x256xf32> to vector<2x128xf32>
    %54 = vector.extract_strided_slice %52 {offsets = [0, 128], sizes = [2, 128], strides = [1, 1]} : vector<2x256xf32> to vector<2x128xf32>
    %55 = vector.extract_strided_slice %43 {offsets = [0, 256], sizes = [2, 128], strides = [1, 1]} : vector<2x384xf32> to vector<2x128xf32>
    %56 = vector.extract_strided_slice %44 {offsets = [0, 256], sizes = [2, 128], strides = [1, 1]} : vector<2x384xf32> to vector<2x128xf32>
    %57 = arith.addf %56, %39 : vector<2x128xf32>
    %58 = arith.mulf %53, %57 : vector<2x128xf32>
    %59 = arith.addf %55, %58 : vector<2x128xf32>
    %60 = math.tanh %59 : vector<2x128xf32>
    %cst_24 = arith.constant 1.000000e+00 : f32
    %61 = vector.broadcast %cst_24 : f32 to vector<2x128xf32>
    %62 = arith.subf %61, %54 : vector<2x128xf32>
    %63 = arith.mulf %62, %60 : vector<2x128xf32>
    %64 = arith.mulf %54, %40 : vector<2x128xf32>
    %65 = arith.addf %63, %64 : vector<2x128xf32>
    %66 = vector.extract_strided_slice %21 {offsets = [1, 0], sizes = [1, 384], strides = [1, 1]} : vector<8x384xf32> to vector<1x384xf32>
    %67 = vector.extract_strided_slice %37 {offsets = [1, 0], sizes = [1, 384], strides = [1, 1]} : vector<8x384xf32> to vector<1x384xf32>
    %68 = tpu.concatenate %66, %67 in 0 : vector<1x384xf32>, vector<1x384xf32> -> vector<2x384xf32>
    %cst_25 = arith.constant dense<0.000000e+00> : vector<2x384xf32>
    %69 = tpu.matmul %65, %4, %cst_25 {dimension_numbers = #tpu.dot_dimension_numbers<[1], [0], [0], [1], [0, 0, 1, 1], [], []>} : vector<2x128xf32>, vector<128x384xf32>, vector<2x384xf32> -> vector<2x384xf32>
    %70 = vector.extract_strided_slice %68 {offsets = [0, 0], sizes = [2, 256], strides = [1, 1]} : vector<2x384xf32> to vector<2x256xf32>
    %71 = vector.extract_strided_slice %69 {offsets = [0, 0], sizes = [2, 256], strides = [1, 1]} : vector<2x384xf32> to vector<2x256xf32>
    %72 = arith.addf %70, %71 : vector<2x256xf32>
    %73 = arith.negf %72 : vector<2x256xf32>
    %74 = math.exp %73 : vector<2x256xf32>
    %cst_26 = arith.constant 1.000000e+00 : f32
    %75 = vector.broadcast %cst_26 : f32 to vector<2x256xf32>
    %76 = arith.addf %75, %74 : vector<2x256xf32>
    %77 = arith.divf %75, %76 : vector<2x256xf32>
    %78 = vector.extract_strided_slice %77 {offsets = [0, 0], sizes = [2, 128], strides = [1, 1]} : vector<2x256xf32> to vector<2x128xf32>
    %79 = vector.extract_strided_slice %77 {offsets = [0, 128], sizes = [2, 128], strides = [1, 1]} : vector<2x256xf32> to vector<2x128xf32>
    %80 = vector.extract_strided_slice %68 {offsets = [0, 256], sizes = [2, 128], strides = [1, 1]} : vector<2x384xf32> to vector<2x128xf32>
    %81 = vector.extract_strided_slice %69 {offsets = [0, 256], sizes = [2, 128], strides = [1, 1]} : vector<2x384xf32> to vector<2x128xf32>
    %82 = arith.addf %81, %39 : vector<2x128xf32>
    %83 = arith.mulf %78, %82 : vector<2x128xf32>
    %84 = arith.addf %80, %83 : vector<2x128xf32>
    %85 = math.tanh %84 : vector<2x128xf32>
    %cst_27 = arith.constant 1.000000e+00 : f32
    %86 = vector.broadcast %cst_27 : f32 to vector<2x128xf32>
    %87 = arith.subf %86, %79 : vector<2x128xf32>
    %88 = arith.mulf %87, %85 : vector<2x128xf32>
    %89 = arith.mulf %79, %65 : vector<2x128xf32>
    %90 = arith.addf %88, %89 : vector<2x128xf32>
    %91 = vector.extract_strided_slice %21 {offsets = [2, 0], sizes = [1, 384], strides = [1, 1]} : vector<8x384xf32> to vector<1x384xf32>
    %92 = vector.extract_strided_slice %37 {offsets = [2, 0], sizes = [1, 384], strides = [1, 1]} : vector<8x384xf32> to vector<1x384xf32>
    %93 = tpu.concatenate %91, %92 in 0 : vector<1x384xf32>, vector<1x384xf32> -> vector<2x384xf32>
    %cst_28 = arith.constant dense<0.000000e+00> : vector<2x384xf32>
    %94 = tpu.matmul %90, %4, %cst_28 {dimension_numbers = #tpu.dot_dimension_numbers<[1], [0], [0], [1], [0, 0, 1, 1], [], []>} : vector<2x128xf32>, vector<128x384xf32>, vector<2x384xf32> -> vector<2x384xf32>
    %95 = vector.extract_strided_slice %93 {offsets = [0, 0], sizes = [2, 256], strides = [1, 1]} : vector<2x384xf32> to vector<2x256xf32>
    %96 = vector.extract_strided_slice %94 {offsets = [0, 0], sizes = [2, 256], strides = [1, 1]} : vector<2x384xf32> to vector<2x256xf32>
    %97 = arith.addf %95, %96 : vector<2x256xf32>
    %98 = arith.negf %97 : vector<2x256xf32>
    %99 = math.exp %98 : vector<2x256xf32>
    %cst_29 = arith.constant 1.000000e+00 : f32
    %100 = vector.broadcast %cst_29 : f32 to vector<2x256xf32>
    %101 = arith.addf %100, %99 : vector<2x256xf32>
    %102 = arith.divf %100, %101 : vector<2x256xf32>
    %103 = vector.extract_strided_slice %102 {offsets = [0, 0], sizes = [2, 128], strides = [1, 1]} : vector<2x256xf32> to vector<2x128xf32>
    %104 = vector.extract_strided_slice %102 {offsets = [0, 128], sizes = [2, 128], strides = [1, 1]} : vector<2x256xf32> to vector<2x128xf32>
    %105 = vector.extract_strided_slice %93 {offsets = [0, 256], sizes = [2, 128], strides = [1, 1]} : vector<2x384xf32> to vector<2x128xf32>
    %106 = vector.extract_strided_slice %94 {offsets = [0, 256], sizes = [2, 128], strides = [1, 1]} : vector<2x384xf32> to vector<2x128xf32>
    %107 = arith.addf %106, %39 : vector<2x128xf32>
    %108 = arith.mulf %103, %107 : vector<2x128xf32>
    %109 = arith.addf %105, %108 : vector<2x128xf32>
    %110 = math.tanh %109 : vector<2x128xf32>
    %cst_30 = arith.constant 1.000000e+00 : f32
    %111 = vector.broadcast %cst_30 : f32 to vector<2x128xf32>
    %112 = arith.subf %111, %104 : vector<2x128xf32>
    %113 = arith.mulf %112, %110 : vector<2x128xf32>
    %114 = arith.mulf %104, %90 : vector<2x128xf32>
    %115 = arith.addf %113, %114 : vector<2x128xf32>
    %116 = vector.extract_strided_slice %21 {offsets = [3, 0], sizes = [1, 384], strides = [1, 1]} : vector<8x384xf32> to vector<1x384xf32>
    %117 = vector.extract_strided_slice %37 {offsets = [3, 0], sizes = [1, 384], strides = [1, 1]} : vector<8x384xf32> to vector<1x384xf32>
    %118 = tpu.concatenate %116, %117 in 0 : vector<1x384xf32>, vector<1x384xf32> -> vector<2x384xf32>
    %cst_31 = arith.constant dense<0.000000e+00> : vector<2x384xf32>
    %119 = tpu.matmul %115, %4, %cst_31 {dimension_numbers = #tpu.dot_dimension_numbers<[1], [0], [0], [1], [0, 0, 1, 1], [], []>} : vector<2x128xf32>, vector<128x384xf32>, vector<2x384xf32> -> vector<2x384xf32>
    %120 = vector.extract_strided_slice %118 {offsets = [0, 0], sizes = [2, 256], strides = [1, 1]} : vector<2x384xf32> to vector<2x256xf32>
    %121 = vector.extract_strided_slice %119 {offsets = [0, 0], sizes = [2, 256], strides = [1, 1]} : vector<2x384xf32> to vector<2x256xf32>
    %122 = arith.addf %120, %121 : vector<2x256xf32>
    %123 = arith.negf %122 : vector<2x256xf32>
    %124 = math.exp %123 : vector<2x256xf32>
    %cst_32 = arith.constant 1.000000e+00 : f32
    %125 = vector.broadcast %cst_32 : f32 to vector<2x256xf32>
    %126 = arith.addf %125, %124 : vector<2x256xf32>
    %127 = arith.divf %125, %126 : vector<2x256xf32>
    %128 = vector.extract_strided_slice %127 {offsets = [0, 0], sizes = [2, 128], strides = [1, 1]} : vector<2x256xf32> to vector<2x128xf32>
    %129 = vector.extract_strided_slice %127 {offsets = [0, 128], sizes = [2, 128], strides = [1, 1]} : vector<2x256xf32> to vector<2x128xf32>
    %130 = vector.extract_strided_slice %118 {offsets = [0, 256], sizes = [2, 128], strides = [1, 1]} : vector<2x384xf32> to vector<2x128xf32>
    %131 = vector.extract_strided_slice %119 {offsets = [0, 256], sizes = [2, 128], strides = [1, 1]} : vector<2x384xf32> to vector<2x128xf32>
    %132 = arith.addf %131, %39 : vector<2x128xf32>
    %133 = arith.mulf %128, %132 : vector<2x128xf32>
    %134 = arith.addf %130, %133 : vector<2x128xf32>
    %135 = math.tanh %134 : vector<2x128xf32>
    %cst_33 = arith.constant 1.000000e+00 : f32
    %136 = vector.broadcast %cst_33 : f32 to vector<2x128xf32>
    %137 = arith.subf %136, %129 : vector<2x128xf32>
    %138 = arith.mulf %137, %135 : vector<2x128xf32>
    %139 = arith.mulf %129, %115 : vector<2x128xf32>
    %140 = arith.addf %138, %139 : vector<2x128xf32>
    %141 = vector.extract_strided_slice %21 {offsets = [4, 0], sizes = [1, 384], strides = [1, 1]} : vector<8x384xf32> to vector<1x384xf32>
    %142 = vector.extract_strided_slice %37 {offsets = [4, 0], sizes = [1, 384], strides = [1, 1]} : vector<8x384xf32> to vector<1x384xf32>
    %143 = tpu.concatenate %141, %142 in 0 : vector<1x384xf32>, vector<1x384xf32> -> vector<2x384xf32>
    %cst_34 = arith.constant dense<0.000000e+00> : vector<2x384xf32>
    %144 = tpu.matmul %140, %4, %cst_34 {dimension_numbers = #tpu.dot_dimension_numbers<[1], [0], [0], [1], [0, 0, 1, 1], [], []>} : vector<2x128xf32>, vector<128x384xf32>, vector<2x384xf32> -> vector<2x384xf32>
    %145 = vector.extract_strided_slice %143 {offsets = [0, 0], sizes = [2, 256], strides = [1, 1]} : vector<2x384xf32> to vector<2x256xf32>
    %146 = vector.extract_strided_slice %144 {offsets = [0, 0], sizes = [2, 256], strides = [1, 1]} : vector<2x384xf32> to vector<2x256xf32>
    %147 = arith.addf %145, %146 : vector<2x256xf32>
    %148 = arith.negf %147 : vector<2x256xf32>
    %149 = math.exp %148 : vector<2x256xf32>
    %cst_35 = arith.constant 1.000000e+00 : f32
    %150 = vector.broadcast %cst_35 : f32 to vector<2x256xf32>
    %151 = arith.addf %150, %149 : vector<2x256xf32>
    %152 = arith.divf %150, %151 : vector<2x256xf32>
    %153 = vector.extract_strided_slice %152 {offsets = [0, 0], sizes = [2, 128], strides = [1, 1]} : vector<2x256xf32> to vector<2x128xf32>
    %154 = vector.extract_strided_slice %152 {offsets = [0, 128], sizes = [2, 128], strides = [1, 1]} : vector<2x256xf32> to vector<2x128xf32>
    %155 = vector.extract_strided_slice %143 {offsets = [0, 256], sizes = [2, 128], strides = [1, 1]} : vector<2x384xf32> to vector<2x128xf32>
    %156 = vector.extract_strided_slice %144 {offsets = [0, 256], sizes = [2, 128], strides = [1, 1]} : vector<2x384xf32> to vector<2x128xf32>
    %157 = arith.addf %156, %39 : vector<2x128xf32>
    %158 = arith.mulf %153, %157 : vector<2x128xf32>
    %159 = arith.addf %155, %158 : vector<2x128xf32>
    %160 = math.tanh %159 : vector<2x128xf32>
    %cst_36 = arith.constant 1.000000e+00 : f32
    %161 = vector.broadcast %cst_36 : f32 to vector<2x128xf32>
    %162 = arith.subf %161, %154 : vector<2x128xf32>
    %163 = arith.mulf %162, %160 : vector<2x128xf32>
    %164 = arith.mulf %154, %140 : vector<2x128xf32>
    %165 = arith.addf %163, %164 : vector<2x128xf32>
    %166 = vector.extract_strided_slice %21 {offsets = [5, 0], sizes = [1, 384], strides = [1, 1]} : vector<8x384xf32> to vector<1x384xf32>
    %167 = vector.extract_strided_slice %37 {offsets = [5, 0], sizes = [1, 384], strides = [1, 1]} : vector<8x384xf32> to vector<1x384xf32>
    %168 = tpu.concatenate %166, %167 in 0 : vector<1x384xf32>, vector<1x384xf32> -> vector<2x384xf32>
    %cst_37 = arith.constant dense<0.000000e+00> : vector<2x384xf32>
    %169 = tpu.matmul %165, %4, %cst_37 {dimension_numbers = #tpu.dot_dimension_numbers<[1], [0], [0], [1], [0, 0, 1, 1], [], []>} : vector<2x128xf32>, vector<128x384xf32>, vector<2x384xf32> -> vector<2x384xf32>
    %170 = vector.extract_strided_slice %168 {offsets = [0, 0], sizes = [2, 256], strides = [1, 1]} : vector<2x384xf32> to vector<2x256xf32>
    %171 = vector.extract_strided_slice %169 {offsets = [0, 0], sizes = [2, 256], strides = [1, 1]} : vector<2x384xf32> to vector<2x256xf32>
    %172 = arith.addf %170, %171 : vector<2x256xf32>
    %173 = arith.negf %172 : vector<2x256xf32>
    %174 = math.exp %173 : vector<2x256xf32>
    %cst_38 = arith.constant 1.000000e+00 : f32
    %175 = vector.broadcast %cst_38 : f32 to vector<2x256xf32>
    %176 = arith.addf %175, %174 : vector<2x256xf32>
    %177 = arith.divf %175, %176 : vector<2x256xf32>
    %178 = vector.extract_strided_slice %177 {offsets = [0, 0], sizes = [2, 128], strides = [1, 1]} : vector<2x256xf32> to vector<2x128xf32>
    %179 = vector.extract_strided_slice %177 {offsets = [0, 128], sizes = [2, 128], strides = [1, 1]} : vector<2x256xf32> to vector<2x128xf32>
    %180 = vector.extract_strided_slice %168 {offsets = [0, 256], sizes = [2, 128], strides = [1, 1]} : vector<2x384xf32> to vector<2x128xf32>
    %181 = vector.extract_strided_slice %169 {offsets = [0, 256], sizes = [2, 128], strides = [1, 1]} : vector<2x384xf32> to vector<2x128xf32>
    %182 = arith.addf %181, %39 : vector<2x128xf32>
    %183 = arith.mulf %178, %182 : vector<2x128xf32>
    %184 = arith.addf %180, %183 : vector<2x128xf32>
    %185 = math.tanh %184 : vector<2x128xf32>
    %cst_39 = arith.constant 1.000000e+00 : f32
    %186 = vector.broadcast %cst_39 : f32 to vector<2x128xf32>
    %187 = arith.subf %186, %179 : vector<2x128xf32>
    %188 = arith.mulf %187, %185 : vector<2x128xf32>
    %189 = arith.mulf %179, %165 : vector<2x128xf32>
    %190 = arith.addf %188, %189 : vector<2x128xf32>
    %191 = vector.extract_strided_slice %21 {offsets = [6, 0], sizes = [1, 384], strides = [1, 1]} : vector<8x384xf32> to vector<1x384xf32>
    %192 = vector.extract_strided_slice %37 {offsets = [6, 0], sizes = [1, 384], strides = [1, 1]} : vector<8x384xf32> to vector<1x384xf32>
    %193 = tpu.concatenate %191, %192 in 0 : vector<1x384xf32>, vector<1x384xf32> -> vector<2x384xf32>
    %cst_40 = arith.constant dense<0.000000e+00> : vector<2x384xf32>
    %194 = tpu.matmul %190, %4, %cst_40 {dimension_numbers = #tpu.dot_dimension_numbers<[1], [0], [0], [1], [0, 0, 1, 1], [], []>} : vector<2x128xf32>, vector<128x384xf32>, vector<2x384xf32> -> vector<2x384xf32>
    %195 = vector.extract_strided_slice %193 {offsets = [0, 0], sizes = [2, 256], strides = [1, 1]} : vector<2x384xf32> to vector<2x256xf32>
    %196 = vector.extract_strided_slice %194 {offsets = [0, 0], sizes = [2, 256], strides = [1, 1]} : vector<2x384xf32> to vector<2x256xf32>
    %197 = arith.addf %195, %196 : vector<2x256xf32>
    %198 = arith.negf %197 : vector<2x256xf32>
    %199 = math.exp %198 : vector<2x256xf32>
    %cst_41 = arith.constant 1.000000e+00 : f32
    %200 = vector.broadcast %cst_41 : f32 to vector<2x256xf32>
    %201 = arith.addf %200, %199 : vector<2x256xf32>
    %202 = arith.divf %200, %201 : vector<2x256xf32>
    %203 = vector.extract_strided_slice %202 {offsets = [0, 0], sizes = [2, 128], strides = [1, 1]} : vector<2x256xf32> to vector<2x128xf32>
    %204 = vector.extract_strided_slice %202 {offsets = [0, 128], sizes = [2, 128], strides = [1, 1]} : vector<2x256xf32> to vector<2x128xf32>
    %205 = vector.extract_strided_slice %193 {offsets = [0, 256], sizes = [2, 128], strides = [1, 1]} : vector<2x384xf32> to vector<2x128xf32>
    %206 = vector.extract_strided_slice %194 {offsets = [0, 256], sizes = [2, 128], strides = [1, 1]} : vector<2x384xf32> to vector<2x128xf32>
    %207 = arith.addf %206, %39 : vector<2x128xf32>
    %208 = arith.mulf %203, %207 : vector<2x128xf32>
    %209 = arith.addf %205, %208 : vector<2x128xf32>
    %210 = math.tanh %209 : vector<2x128xf32>
    %cst_42 = arith.constant 1.000000e+00 : f32
    %211 = vector.broadcast %cst_42 : f32 to vector<2x128xf32>
    %212 = arith.subf %211, %204 : vector<2x128xf32>
    %213 = arith.mulf %212, %210 : vector<2x128xf32>
    %214 = arith.mulf %204, %190 : vector<2x128xf32>
    %215 = arith.addf %213, %214 : vector<2x128xf32>
    %216 = vector.extract_strided_slice %21 {offsets = [7, 0], sizes = [1, 384], strides = [1, 1]} : vector<8x384xf32> to vector<1x384xf32>
    %217 = vector.extract_strided_slice %37 {offsets = [7, 0], sizes = [1, 384], strides = [1, 1]} : vector<8x384xf32> to vector<1x384xf32>
    %218 = tpu.concatenate %216, %217 in 0 : vector<1x384xf32>, vector<1x384xf32> -> vector<2x384xf32>
    %cst_43 = arith.constant dense<0.000000e+00> : vector<2x384xf32>
    %219 = tpu.matmul %215, %4, %cst_43 {dimension_numbers = #tpu.dot_dimension_numbers<[1], [0], [0], [1], [0, 0, 1, 1], [], []>} : vector<2x128xf32>, vector<128x384xf32>, vector<2x384xf32> -> vector<2x384xf32>
    %220 = vector.extract_strided_slice %218 {offsets = [0, 0], sizes = [2, 256], strides = [1, 1]} : vector<2x384xf32> to vector<2x256xf32>
    %221 = vector.extract_strided_slice %219 {offsets = [0, 0], sizes = [2, 256], strides = [1, 1]} : vector<2x384xf32> to vector<2x256xf32>
    %222 = arith.addf %220, %221 : vector<2x256xf32>
    %223 = arith.negf %222 : vector<2x256xf32>
    %224 = math.exp %223 : vector<2x256xf32>
    %cst_44 = arith.constant 1.000000e+00 : f32
    %225 = vector.broadcast %cst_44 : f32 to vector<2x256xf32>
    %226 = arith.addf %225, %224 : vector<2x256xf32>
    %227 = arith.divf %225, %226 : vector<2x256xf32>
    %228 = vector.extract_strided_slice %227 {offsets = [0, 0], sizes = [2, 128], strides = [1, 1]} : vector<2x256xf32> to vector<2x128xf32>
    %229 = vector.extract_strided_slice %227 {offsets = [0, 128], sizes = [2, 128], strides = [1, 1]} : vector<2x256xf32> to vector<2x128xf32>
    %230 = vector.extract_strided_slice %218 {offsets = [0, 256], sizes = [2, 128], strides = [1, 1]} : vector<2x384xf32> to vector<2x128xf32>
    %231 = vector.extract_strided_slice %219 {offsets = [0, 256], sizes = [2, 128], strides = [1, 1]} : vector<2x384xf32> to vector<2x128xf32>
    %232 = arith.addf %231, %39 : vector<2x128xf32>
    %233 = arith.mulf %228, %232 : vector<2x128xf32>
    %234 = arith.addf %230, %233 : vector<2x128xf32>
    %235 = math.tanh %234 : vector<2x128xf32>
    %cst_45 = arith.constant 1.000000e+00 : f32
    %236 = vector.broadcast %cst_45 : f32 to vector<2x128xf32>
    %237 = arith.subf %236, %229 : vector<2x128xf32>
    %238 = arith.mulf %237, %235 : vector<2x128xf32>
    %239 = arith.mulf %229, %215 : vector<2x128xf32>
    %240 = arith.addf %238, %239 : vector<2x128xf32>
    %241 = vector.extract_strided_slice %240 {offsets = [0, 0], sizes = [2, 32], strides = [1, 1]} : vector<2x128xf32> to vector<2x32xf32>
    %c16_46 = arith.constant 16 : index
    %c0_47 = arith.constant 0 : index
    %242 = vector.load %arg2[%c16_46, %c0_47] : memref<160x128xf32, #tpu.memory_space<vmem>>, vector<32x32xf32>
    %c48 = arith.constant 48 : index
    %c0_48 = arith.constant 0 : index
    %243 = vector.load %arg2[%c48, %c0_48] : memref<160x128xf32, #tpu.memory_space<vmem>>, vector<1x32xf32>
    %cst_49 = arith.constant dense<0.000000e+00> : vector<2x32xf32>
    %244 = tpu.matmul %241, %242, %cst_49 {dimension_numbers = #tpu.dot_dimension_numbers<[1], [0], [0], [1], [0, 0, 1, 1], [], []>} : vector<2x32xf32>, vector<32x32xf32>, vector<2x32xf32> -> vector<2x32xf32>
    %245 = vector.broadcast %243 : vector<1x32xf32> to vector<2x32xf32>
    %246 = arith.addf %244, %245 : vector<2x32xf32>
    %cst_50 = arith.constant 0.000000e+00 : f32
    %247 = vector.broadcast %cst_50 : f32 to vector<2x32xf32>
    %248 = arith.maximumf %246, %247 : vector<2x32xf32>
    %c56 = arith.constant 56 : index
    %c0_51 = arith.constant 0 : index
    %249 = vector.load %arg2[%c56, %c0_51] : memref<160x128xf32, #tpu.memory_space<vmem>>, vector<32x16xf32>
    %c88 = arith.constant 88 : index
    %c0_52 = arith.constant 0 : index
    %250 = vector.load %arg2[%c88, %c0_52] : memref<160x128xf32, #tpu.memory_space<vmem>>, vector<1x16xf32>
    %cst_53 = arith.constant dense<0.000000e+00> : vector<2x16xf32>
    %251 = tpu.matmul %248, %249, %cst_53 {dimension_numbers = #tpu.dot_dimension_numbers<[1], [0], [0], [1], [0, 0, 1, 1], [], []>} : vector<2x32xf32>, vector<32x16xf32>, vector<2x16xf32> -> vector<2x16xf32>
    %252 = vector.broadcast %250 : vector<1x16xf32> to vector<2x16xf32>
    %253 = arith.addf %251, %252 : vector<2x16xf32>
    %cst_54 = arith.constant 0.000000e+00 : f32
    %254 = vector.broadcast %cst_54 : f32 to vector<2x16xf32>
    %255 = arith.maximumf %253, %254 : vector<2x16xf32>
    %c96 = arith.constant 96 : index
    %c0_55 = arith.constant 0 : index
    %256 = vector.load %arg2[%c96, %c0_55] : memref<160x128xf32, #tpu.memory_space<vmem>>, vector<16x16xf32>
    %c112 = arith.constant 112 : index
    %c0_56 = arith.constant 0 : index
    %257 = vector.load %arg2[%c112, %c0_56] : memref<160x128xf32, #tpu.memory_space<vmem>>, vector<1x16xf32>
    %cst_57 = arith.constant dense<0.000000e+00> : vector<2x16xf32>
    %258 = tpu.matmul %255, %256, %cst_57 {dimension_numbers = #tpu.dot_dimension_numbers<[1], [0], [0], [1], [0, 0, 1, 1], [], []>} : vector<2x16xf32>, vector<16x16xf32>, vector<2x16xf32> -> vector<2x16xf32>
    %259 = vector.broadcast %257 : vector<1x16xf32> to vector<2x16xf32>
    %260 = arith.addf %258, %259 : vector<2x16xf32>
    %cst_58 = arith.constant 0.000000e+00 : f32
    %261 = vector.broadcast %cst_58 : f32 to vector<2x16xf32>
    %262 = arith.maximumf %260, %261 : vector<2x16xf32>
    %c120 = arith.constant 120 : index
    %c0_59 = arith.constant 0 : index
    %263 = vector.load %arg2[%c120, %c0_59] : memref<160x128xf32, #tpu.memory_space<vmem>>, vector<16x8xf32>
    %c136 = arith.constant 136 : index
    %c0_60 = arith.constant 0 : index
    %264 = vector.load %arg2[%c136, %c0_60] : memref<160x128xf32, #tpu.memory_space<vmem>>, vector<1x8xf32>
    %cst_61 = arith.constant dense<0.000000e+00> : vector<2x8xf32>
    %265 = tpu.matmul %262, %263, %cst_61 {dimension_numbers = #tpu.dot_dimension_numbers<[1], [0], [0], [1], [0, 0, 1, 1], [], []>} : vector<2x16xf32>, vector<16x8xf32>, vector<2x8xf32> -> vector<2x8xf32>
    %266 = vector.broadcast %264 : vector<1x8xf32> to vector<2x8xf32>
    %267 = arith.addf %265, %266 : vector<2x8xf32>
    %cst_62 = arith.constant 0.000000e+00 : f32
    %268 = vector.broadcast %cst_62 : f32 to vector<2x8xf32>
    %269 = arith.maximumf %267, %268 : vector<2x8xf32>
    %c144 = arith.constant 144 : index
    %c0_63 = arith.constant 0 : index
    %270 = vector.load %arg2[%c144, %c0_63] : memref<160x128xf32, #tpu.memory_space<vmem>>, vector<8x1xf32>
    %c152_64 = arith.constant 152 : index
    %c0_65 = arith.constant 0 : index
    %271 = vector.load %arg2[%c152_64, %c0_65] : memref<160x128xf32, #tpu.memory_space<vmem>>, vector<1x1xf32>
    %cst_66 = arith.constant dense<0.000000e+00> : vector<2x1xf32>
    %272 = tpu.matmul %269, %270, %cst_66 {dimension_numbers = #tpu.dot_dimension_numbers<[1], [0], [0], [1], [0, 0, 1, 1], [], []>} : vector<2x8xf32>, vector<8x1xf32>, vector<2x1xf32> -> vector<2x1xf32>
    %273 = vector.broadcast %271 : vector<1x1xf32> to vector<2x1xf32>
    %274 = arith.addf %272, %273 : vector<2x1xf32>
    %275 = arith.negf %274 : vector<2x1xf32>
    %276 = math.exp %275 : vector<2x1xf32>
    %cst_67 = arith.constant 1.000000e+00 : f32
    %277 = vector.broadcast %cst_67 : f32 to vector<2x1xf32>
    %278 = arith.addf %277, %276 : vector<2x1xf32>
    %279 = arith.divf %277, %278 : vector<2x1xf32>
    %c0_68 = arith.constant 0 : index
    %c0_69 = arith.constant 0 : index
    %280 = vector.load %arg3[%c0_68, %c0_69] : memref<2x1xf32, #tpu.memory_space<vmem>>, vector<2x1xf32>
    tpu.vector_store %arg3[%c0_68, %c0_69], %279 {strides = array<i32>} : memref<2x1xf32, #tpu.memory_space<vmem>>, vector<2x1xf32>,
    return
  }
}

</mosaic_0001>

<llo_original>
// kernel: forward.1
$region0: #{forward.1}
  #allocation0 [shape = 'u32[]', space=smem, size = 0x4, offset = 0x4, fixed_abs, tag = 'smem constant byte address 0x4 - core index']
  #allocation1 [shape = 'u32[144,128]{1,0:T(1,128)}', space=vmem, size = 0x12000, scoped, tag = 'internal scratch']
  %s0 = inlined_call_operand.vmem [shape: f32[2,8,4], index: 0, kind: input, shape index: {}]
  %s1 = inlined_call_operand.hbm [shape: f32[160,384], index: 1, kind: input, shape index: {}]
  %s2 = inlined_call_operand.hbm [shape: f32[160,128], index: 2, kind: input, shape index: {}]
  %s3 = inlined_call_operand.vmem [shape: f32[2,1], index: 3, kind: output, shape index: {}]
  %s4 = sld [smem:[#allocation0]]
  $region30: #{forward.1} parent=0
    _
  %s6 = ssub.s32 1, %s4
  %s7 = scalar_select 0, %s6, %s4
  $region1: #{forward.1} parent=0
    #allocation2 [shape = 'u8[245760]{0}', space=vmem, size = 0x3c000, scoped, tag = 'input window, operand 1, single buffered']
    #allocation3 [shape = 's32[1]{0}', space=sflag, size = 0x4, scoped, tag = 'scoped memory for forward.1']
    #allocation4 [shape = 'u8[81920]{0}', space=vmem, size = 0x14000, scoped, tag = 'input window, operand 2, single buffered']
    #allocation5 [shape = 's32[1]{0}', space=sflag, size = 0x4, scoped, tag = 'scoped memory for forward.1']
    %8 = vsyncpa [#allocation3], 0
    %9 = vsyncpa [#allocation5], 0
    // Predicated region
    $region2: #{forward.1} parent=1 // pred_check
      _
    $region3: #{forward.1} parent=1 // pred_check_branch
      %11 = sbr.rel (0) target = $region5
    $region4: #{forward.1} parent=1 // pred_region
      _
    $region5: #{forward.1} parent=1 // pred_fallthru
      _
    // Predicated region
    $region6: #{forward.1} parent=1 // pred_check
      _
    $region7: #{forward.1} parent=1 // pred_check_branch
      %13 = sbr.rel (0) target = $region9
    $region8: #{forward.1} parent=1 // pred_region
      %s15 = ssub.s32 7680, 7680
      %16 = vsyncadd [#allocation3], %s15
      %s17 = sshll.u32 [#allocation2], 4
      %s18 = int_to_ptr.vmem [resolvable:$true] %s17
      %23 = dma.hbm_to_vmem [thread:$0]  %s1, 7680, %s18, [#allocation3], 384, 384, 24
    $region9: #{forward.1} parent=1 // pred_fallthru
      _
    // Predicated region
    $region10: #{forward.1} parent=1 // pred_check
      _
    $region11: #{forward.1} parent=1 // pred_check_branch
      %25 = sbr.rel (0) target = $region13
    $region12: #{forward.1} parent=1 // pred_region
      %s27 = ssub.s32 2560, 2560
      %28 = vsyncadd [#allocation5], %s27
      %s29 = sshll.u32 [#allocation4], 4
      %s30 = int_to_ptr.vmem [resolvable:$true] %s29
      %35 = dma.hbm_to_vmem [thread:$0]  %s2, 2560, %s30, [#allocation5], 128, 128, 8
    $region13: #{forward.1} parent=1 // pred_fallthru
      _
    // Predicated region
    $region14: #{forward.1} parent=1 // pred_check
      _
    $region15: #{forward.1} parent=1 // pred_check_branch
      %37 = sbr.rel (0) target = $region17
    $region16: #{forward.1} parent=1 // pred_region
      %38 = dma.done [#allocation3], 7680
    $region17: #{forward.1} parent=1 // pred_fallthru
      _
    // Predicated region
    $region18: #{forward.1} parent=1 // pred_check
      _
    $region19: #{forward.1} parent=1 // pred_check_branch
      %40 = sbr.rel (0) target = $region21
    $region20: #{forward.1} parent=1 // pred_region
      %41 = dma.done [#allocation5], 2560
    $region21: #{forward.1} parent=1 // pred_fallthru
      _
    %v42 = vld [vmem:[#allocation4] sm:$0xf]
    %v43 = vld [vmem:[#allocation4 + $0x8] sm:$0x1]
    %v44 = vld [vmem:[#allocation2] sm:$0xff]
    %v45 = vld [vmem:[#allocation2 + $0x8] sm:$0xff]
    %v46 = vld [vmem:[#allocation2 + $0x10] sm:$0xff]
    %v47 = vld [vmem:[#allocation2 + $0x18] sm:$0xff]
    %v48 = vld [vmem:[#allocation2 + $0x20] sm:$0xff]
    %v49 = vld [vmem:[#allocation2 + $0x28] sm:$0xff]
    %s50 = scalar_lea.vmem [#allocation2], 48
    %v51 = vld [vmem:[%s50] ss:$8 sm:$0x7]
    %v52 = vld [vmem:[#allocation2 + $0x48] sm:$0xff]
    %v53 = vld [vmem:[#allocation2 + $0x50] sm:$0xff]
    %v54 = vld [vmem:[#allocation2 + $0x58] sm:$0xff]
    %v55 = vld [vmem:[#allocation2 + $0x60] sm:$0xff]
    %v56 = vld [vmem:[#allocation2 + $0x68] sm:$0xff]
    %v57 = vld [vmem:[#allocation2 + $0x70] sm:$0xff]
    %v58 = vld [vmem:[#allocation2 + $0x78] sm:$0xff]
    %v59 = vld [vmem:[#allocation2 + $0x80] sm:$0xff]
    %v60 = vld [vmem:[#allocation2 + $0x88] sm:$0xff]
    %v61 = vld [vmem:[#allocation2 + $0x90] sm:$0xff]
    %v62 = vld [vmem:[#allocation2 + $0x98] sm:$0xff]
    %v63 = vld [vmem:[#allocation2 + $0xa0] sm:$0xff]
    %v64 = vld [vmem:[#allocation2 + $0xa8] sm:$0xff]
    %v65 = vld [vmem:[#allocation2 + $0xb0] sm:$0xff]
    %v66 = vld [vmem:[#allocation2 + $0xb8] sm:$0xff]
    %v67 = vld [vmem:[#allocation2 + $0xc0] sm:$0xff]
    %v68 = vld [vmem:[#allocation2 + $0xc8] sm:$0xff]
    %v69 = vld [vmem:[#allocation2 + $0xd0] sm:$0xff]
    %v70 = vld [vmem:[#allocation2 + $0xd8] sm:$0xff]
    %v71 = vld [vmem:[#allocation2 + $0xe0] sm:$0xff]
    %v72 = vld [vmem:[#allocation2 + $0xe8] sm:$0xff]
    %v73 = vld [vmem:[#allocation2 + $0xf0] sm:$0xff]
    %v74 = vld [vmem:[#allocation2 + $0xf8] sm:$0xff]
    %v75 = vld [vmem:[#allocation2 + $0x100] sm:$0xff]
    %v76 = vld [vmem:[#allocation2 + $0x108] sm:$0xff]
    %v77 = vld [vmem:[#allocation2 + $0x110] sm:$0xff]
    %v78 = vld [vmem:[#allocation2 + $0x118] sm:$0xff]
    %v79 = vld [vmem:[#allocation2 + $0x120] sm:$0xff]
    %v80 = vld [vmem:[#allocation2 + $0x128] sm:$0xff]
    %v81 = vld [vmem:[#allocation2 + $0x130] sm:$0xff]
    %v82 = vld [vmem:[#allocation2 + $0x138] sm:$0xff]
    %v83 = vld [vmem:[#allocation2 + $0x140] sm:$0xff]
    %v84 = vld [vmem:[#allocation2 + $0x148] sm:$0xff]
    %v85 = vld [vmem:[#allocation2 + $0x150] sm:$0xff]
    %v86 = vld [vmem:[#allocation2 + $0x158] sm:$0xff]
    %v87 = vld [vmem:[#allocation2 + $0x160] sm:$0xff]
    %v88 = vld [vmem:[#allocation2 + $0x168] sm:$0xff]
    %v89 = vld [vmem:[#allocation2 + $0x170] sm:$0xff]
    %v90 = vld [vmem:[#allocation2 + $0x178] sm:$0xff]
    %v91 = vld [vmem:[#allocation2 + $0x180] sm:$0xff]
    %v92 = vld [vmem:[#allocation2 + $0x188] sm:$0xff]
    %v93 = vld [vmem:[#allocation2 + $0x190] sm:$0xff]
    %v94 = vld [vmem:[#allocation2 + $0x198] sm:$0xff]
    %v95 = vld [vmem:[#allocation2 + $0x1a0] sm:$0xff]
    %v96 = vld [vmem:[#allocation2 + $0x1a8] sm:$0xff]
    %v97 = vld [vmem:[#allocation2 + $0x1b0] sm:$0xff]
    %v98 = vld [vmem:[#allocation2 + $0x1b8] sm:$0xff]
    %v99 = vld [vmem:[#allocation2 + $0x1c0] sm:$0xff]
    %v100 = vld [vmem:[#allocation2 + $0x1c8] ss:$0 sm:$0xff]
    %v101 = vld [vmem:[%s0] sm:$0xff]
    %vm102 = vcmp.ne.f32.partialorder %v101, %v101
    %v103 = vsel %vm102, 0.0, %v101
    %v104 = vmax.f32 %v103, -3.4028235e+38
    %v105 = vmin.f32 %v104, 3.4028235e+38
    %v106 = vlaneseq
    %v107 = vshrl.u32 %v106, 7
    %v108 = vsub.s32 0, %v107
    %v109 = vrot.slane %v43, %v108
    %vm110 = vcmask 31744
    %v112 = vsel %vm110, %v105, 0
    %vm114 = vcmask 1043456
    %v116 = vsel %vm114, %v42, 0
    %118 = vmatprep.subr.mxu0 0.0
    %119 = vmatpush1.msra.mxu0 %v116
    %120 = vmatprep.subr.mxu0 0.0
    %121 = vmatpush1.msra.mxu0 0.0
    %122 = vmatprep.subr.mxu0 0.0
    %123 = vmatpush1.msra.mxu0 0.0
    %124 = vmatprep.subr.mxu0 0.0
    %125 = vmatpush1.msra.mxu0 0.0
    %126 = vmatprep.subr.mxu0 0.0
    %127 = vmatpush1.msra.mxu0 0.0
    %128 = vmatprep.subr.mxu0 0.0
    %129 = vmatpush1.msra.mxu0 0.0
    %130 = vmatprep.subr.mxu0 0.0
    %131 = vmatpush1.msra.mxu0 0.0
    %132 = vmatprep.subr.mxu0 0.0
    %133 = vmatpush1.msra.mxu0 0.0
    %134 = vmatprep.subr.mxu0 0.0
    %135 = vmatpush1.msra.mxu0 0.0
    %136 = vmatprep.subr.mxu0 0.0
    %137 = vmatpush1.msra.mxu0 0.0
    %138 = vmatprep.subr.mxu0 0.0
    %139 = vmatpush1.msra.mxu0 0.0
    %140 = vmatprep.subr.mxu0 0.0
    %141 = vmatpush1.msra.mxu0 0.0
    %142 = vmatprep.subr.mxu0 0.0
    %143 = vmatpush1.msra.mxu0 0.0
    %144 = vmatprep.subr.mxu0 0.0
    %145 = vmatpush1.msra.mxu0 0.0
    %146 = vmatprep.subr.mxu0 0.0
    %147 = vmatpush1.msra.mxu0 0.0
    %148 = vmatprep.subr.mxu0 0.0
    %149 = vmatpush1.msra.mxu0 0.0
    %150 = vmatprep.subr.mxu0 0.0
    %151 = vmatpush1.msra.mxu0 0.0
    %152 = vmatprep.subr.mxu0 0.0
    %153 = vmatpush1.msra.mxu0 0.0
    %154 = vmatprep.subr.mxu0 0.0
    %155 = vmatpush1.msra.mxu0 0.0
    %156 = vmatprep.subr.mxu0 0.0
    %157 = vmatpush1.msra.mxu0 0.0
    %158 = vmatprep.subr.mxu0 0.0
    %159 = vmatpush1.msra.mxu0 0.0
    %160 = vmatprep.subr.mxu0 0.0
    %161 = vmatpush1.msra.mxu0 0.0
    %162 = vmatprep.subr.mxu0 0.0
    %163 = vmatpush1.msra.mxu0 0.0
    %164 = vmatprep.subr.mxu0 0.0
    %165 = vmatpush1.msra.mxu0 0.0
    %166 = vmatprep.subr.mxu0 0.0
    %167 = vmatpush1.msra.mxu0 0.0
    %168 = vmatprep.subr.mxu0 0.0
    %169 = vmatpush1.msra.mxu0 0.0
    %170 = vmatprep.subr.mxu0 0.0
    %171 = vmatpush1.msra.mxu0 0.0
    %172 = vmatprep.subr.mxu0 0.0
    %173 = vmatpush1.msra.mxu0 0.0
    %174 = vmatprep.subr.mxu0 0.0
    %175 = vmatpush1.msra.mxu0 0.0
    %176 = vmatprep.subr.mxu0 0.0
    %177 = vmatpush1.msra.mxu0 0.0
    %178 = vmatprep.subr.mxu0 0.0
    %179 = vmatpush1.msra.mxu0 0.0
    %180 = vmatprep.subr.mxu0 0.0
    %181 = vmatpush1.msra.mxu0 0.0
    %182 = vmatprep.mubr.f32.mxu0 0.0
    %183 = vmatmul.mubr.f32.gmra.mrb[0].mxu0 %v112
    %v184 = vpop.f32.mrb[0].mxu0
    %v185 = vadd.f32 %v109, %v184
    %v186 = vpop.f32.mrb[0].mxu0
    %187 = vdwg.mxu0
    %v188 = vtanh.pop %v185
    %v190 = vlaneseq
    %v191 = vshrl.u32 %v190, 7
    %v192 = vsub.s32 0, %v191
    %v193 = vrot.slane %v51, %v192
    %v194 = vlaneseq
    %v195 = vshrl.u32 %v194, 7
    %v196 = vsub.s32 1, %v195
    %v197 = vrot.slane %v51, %v196
    %v198 = vlaneseq
    %v199 = vshrl.u32 %v198, 7
    %v200 = vsub.s32 2, %v199
    %v201 = vrot.slane %v51, %v200
    %vm205 = vcmask 130048
    %v207 = vsel %vm205, %v188, 0
    %209 = vmatprep.subr.mxu0 %v45
    %210 = vmatpush1.msra.mxu0 %v44
    %211 = vmatprep.subr.mxu0 %v48
    %212 = vmatpush1.msra.mxu0 %v47
    %213 = vmatprep.subr.mxu0 0.0
    %214 = vmatpush1.msra.mxu0 0.0
    %215 = vmatprep.subr.mxu0 0.0
    %216 = vmatpush1.msra.mxu0 0.0
    %217 = vmatprep.subr.mxu0 0.0
    %218 = vmatpush1.msra.mxu0 0.0
    %219 = vmatprep.subr.mxu0 0.0
    %220 = vmatpush1.msra.mxu0 0.0
    %221 = vmatprep.subr.mxu0 0.0
    %222 = vmatpush1.msra.mxu0 0.0
    %223 = vmatprep.subr.mxu0 0.0
    %224 = vmatpush1.msra.mxu0 0.0
    %225 = vmatprep.subr.mxu0 0.0
    %226 = vmatpush1.msra.mxu0 0.0
    %227 = vmatprep.subr.mxu0 0.0
    %228 = vmatpush1.msra.mxu0 0.0
    %229 = vmatprep.subr.mxu0 0.0
    %230 = vmatpush1.msra.mxu0 0.0
    %231 = vmatprep.subr.mxu0 0.0
    %232 = vmatpush1.msra.mxu0 0.0
    %233 = vmatprep.subr.mxu0 0.0
    %234 = vmatpush1.msra.mxu0 0.0
    %235 = vmatprep.subr.mxu0 0.0
    %236 = vmatpush1.msra.mxu0 0.0
    %237 = vmatprep.subr.mxu0 0.0
    %238 = vmatpush1.msra.mxu0 0.0
    %239 = vmatprep.subr.mxu0 0.0
    %240 = vmatpush1.msra.mxu0 0.0
    %241 = vmatprep.subr.mxu0 0.0
    %242 = vmatpush1.msra.mxu0 0.0
    %243 = vmatprep.subr.mxu0 0.0
    %244 = vmatpush1.msra.mxu0 0.0
    %245 = vmatprep.subr.mxu0 0.0
    %246 = vmatpush1.msra.mxu0 0.0
    %247 = vmatprep.subr.mxu0 0.0
    %248 = vmatpush1.msra.mxu0 0.0
    %249 = vmatprep.subr.mxu0 0.0
    %250 = vmatpush1.msra.mxu0 0.0
    %251 = vmatprep.subr.mxu0 0.0
    %252 = vmatpush1.msra.mxu0 0.0
    %253 = vmatprep.subr.mxu0 0.0
    %254 = vmatpush1.msra.mxu0 0.0
    %255 = vmatprep.subr.mxu0 0.0
    %256 = vmatpush1.msra.mxu0 0.0
    %257 = vmatprep.subr.mxu0 0.0
    %258 = vmatpush1.msra.mxu0 0.0
    %259 = vmatprep.subr.mxu0 0.0
    %260 = vmatpush1.msra.mxu0 0.0
    %261 = vmatprep.subr.mxu0 0.0
    %262 = vmatpush1.msra.mxu0 0.0
    %263 = vmatprep.subr.mxu0 0.0
    %264 = vmatpush1.msra.mxu0 0.0
    %265 = vmatprep.subr.mxu0 0.0
    %266 = vmatpush1.msra.mxu0 0.0
    %267 = vmatprep.subr.mxu0 0.0
    %268 = vmatpush1.msra.mxu0 0.0
    %269 = vmatprep.subr.mxu0 0.0
    %270 = vmatpush1.msra.mxu0 0.0
    %271 = vmatprep.subr.mxu0 0.0
    %272 = vmatpush1.msra.mxu0 0.0
    %273 = vmatprep.mubr.f32.mxu0 0.0
    %274 = vmatmul.mubr.f32.gmra.mrb[0].mxu0 %v207
    %v275 = vpop.f32.mrb[0].mxu0
    %v276 = vadd.f32 %v193, %v275
    %v277 = vpop.f32.mrb[0].mxu0
    %v278 = vadd.f32 %v197, %v277
    %279 = vdwg.mxu0
    %280 = vmatprep.subr.mxu0 0.0
    %281 = vmatpush1.msra.mxu0 %v46
    %282 = vmatprep.subr.mxu0 0.0
    %283 = vmatpush1.msra.mxu0 %v49
    %284 = vmatprep.subr.mxu0 0.0
    %285 = vmatpush1.msra.mxu0 0.0
    %286 = vmatprep.subr.mxu0 0.0
    %287 = vmatpush1.msra.mxu0 0.0
    %288 = vmatprep.subr.mxu0 0.0
    %289 = vmatpush1.msra.mxu0 0.0
    %290 = vmatprep.subr.mxu0 0.0
    %291 = vmatpush1.msra.mxu0 0.0
    %292 = vmatprep.subr.mxu0 0.0
    %293 = vmatpush1.msra.mxu0 0.0
    %294 = vmatprep.subr.mxu0 0.0
    %295 = vmatpush1.msra.mxu0 0.0
    %296 = vmatprep.subr.mxu0 0.0
    %297 = vmatpush1.msra.mxu0 0.0
    %298 = vmatprep.subr.mxu0 0.0
    %299 = vmatpush1.msra.mxu0 0.0
    %300 = vmatprep.subr.mxu0 0.0
    %301 = vmatpush1.msra.mxu0 0.0
    %302 = vmatprep.subr.mxu0 0.0
    %303 = vmatpush1.msra.mxu0 0.0
    %304 = vmatprep.subr.mxu0 0.0
    %305 = vmatpush1.msra.mxu0 0.0
    %306 = vmatprep.subr.mxu0 0.0
    %307 = vmatpush1.msra.mxu0 0.0
    %308 = vmatprep.subr.mxu0 0.0
    %309 = vmatpush1.msra.mxu0 0.0
    %310 = vmatprep.subr.mxu0 0.0
    %311 = vmatpush1.msra.mxu0 0.0
    %312 = vmatprep.subr.mxu0 0.0
    %313 = vmatpush1.msra.mxu0 0.0
    %314 = vmatprep.subr.mxu0 0.0
    %315 = vmatpush1.msra.mxu0 0.0
    %316 = vmatprep.subr.mxu0 0.0
    %317 = vmatpush1.msra.mxu0 0.0
    %318 = vmatprep.subr.mxu0 0.0
    %319 = vmatpush1.msra.mxu0 0.0
    %320 = vmatprep.subr.mxu0 0.0
    %321 = vmatpush1.msra.mxu0 0.0
    %322 = vmatprep.subr.mxu0 0.0
    %323 = vmatpush1.msra.mxu0 0.0
    %324 = vmatprep.subr.mxu0 0.0
    %325 = vmatpush1.msra.mxu0 0.0
    %326 = vmatprep.subr.mxu0 0.0
    %327 = vmatpush1.msra.mxu0 0.0
    %328 = vmatprep.subr.mxu0 0.0
    %329 = vmatpush1.msra.mxu0 0.0
    %330 = vmatprep.subr.mxu0 0.0
    %331 = vmatpush1.msra.mxu0 0.0
    %332 = vmatprep.subr.mxu0 0.0
    %333 = vmatpush1.msra.mxu0 0.0
    %334 = vmatprep.subr.mxu0 0.0
    %335 = vmatpush1.msra.mxu0 0.0
    %336 = vmatprep.subr.mxu0 0.0
    %337 = vmatpush1.msra.mxu0 0.0
    %338 = vmatprep.subr.mxu0 0.0
    %339 = vmatpush1.msra.mxu0 0.0
    %340 = vmatprep.subr.mxu0 0.0
    %341 = vmatpush1.msra.mxu0 0.0
    %342 = vmatprep.subr.mxu0 0.0
    %343 = vmatpush1.msra.mxu0 0.0
    %344 = vmatprep.mubr.f32.mxu0 0.0
    %345 = vmatmul.mubr.f32.gmra.mrb[0].mxu0 %v207
    %v346 = vpop.f32.mrb[0].mxu0
    %v347 = vadd.f32 %v201, %v346
    %v348 = vpop.f32.mrb[0].mxu0
    %349 = vdwg.mxu0
    %s350 = scalar_lea.vmem %s0, 8
    %v351 = vld [vmem:[%s350] sm:$0xff]
    %vm352 = vcmp.ne.f32.partialorder %v351, %v351
    %v353 = vsel %vm352, 0.0, %v351
    %v354 = vmax.f32 %v353, -3.4028235e+38
    %v355 = vmin.f32 %v354, 3.4028235e+38
    %v357 = vsel %vm110, %v355, 0
    %359 = vmatprep.subr.mxu0 0.0
    %360 = vmatpush1.msra.mxu0 %v116
    %361 = vmatprep.subr.mxu0 0.0
    %362 = vmatpush1.msra.mxu0 0.0
    %363 = vmatprep.subr.mxu0 0.0
    %364 = vmatpush1.msra.mxu0 0.0
    %365 = vmatprep.subr.mxu0 0.0
    %366 = vmatpush1.msra.mxu0 0.0
    %367 = vmatprep.subr.mxu0 0.0
    %368 = vmatpush1.msra.mxu0 0.0
    %369 = vmatprep.subr.mxu0 0.0
    %370 = vmatpush1.msra.mxu0 0.0
    %371 = vmatprep.subr.mxu0 0.0
    %372 = vmatpush1.msra.mxu0 0.0
    %373 = vmatprep.subr.mxu0 0.0
    %374 = vmatpush1.msra.mxu0 0.0
    %375 = vmatprep.subr.mxu0 0.0
    %376 = vmatpush1.msra.mxu0 0.0
    %377 = vmatprep.subr.mxu0 0.0
    %378 = vmatpush1.msra.mxu0 0.0
    %379 = vmatprep.subr.mxu0 0.0
    %380 = vmatpush1.msra.mxu0 0.0
    %381 = vmatprep.subr.mxu0 0.0
    %382 = vmatpush1.msra.mxu0 0.0
    %383 = vmatprep.subr.mxu0 0.0
    %384 = vmatpush1.msra.mxu0 0.0
    %385 = vmatprep.subr.mxu0 0.0
    %386 = vmatpush1.msra.mxu0 0.0
    %387 = vmatprep.subr.mxu0 0.0
    %388 = vmatpush1.msra.mxu0 0.0
    %389 = vmatprep.subr.mxu0 0.0
    %390 = vmatpush1.msra.mxu0 0.0
    %391 = vmatprep.subr.mxu0 0.0
    %392 = vmatpush1.msra.mxu0 0.0
    %393 = vmatprep.subr.mxu0 0.0
    %394 = vmatpush1.msra.mxu0 0.0
    %395 = vmatprep.subr.mxu0 0.0
    %396 = vmatpush1.msra.mxu0 0.0
    %397 = vmatprep.subr.mxu0 0.0
    %398 = vmatpush1.msra.mxu0 0.0
    %399 = vmatprep.subr.mxu0 0.0
    %400 = vmatpush1.msra.mxu0 0.0
    %401 = vmatprep.subr.mxu0 0.0
    %402 = vmatpush1.msra.mxu0 0.0
    %403 = vmatprep.subr.mxu0 0.0
    %404 = vmatpush1.msra.mxu0 0.0
    %405 = vmatprep.subr.mxu0 0.0
    %406 = vmatpush1.msra.mxu0 0.0
    %407 = vmatprep.subr.mxu0 0.0
    %408 = vmatpush1.msra.mxu0 0.0
    %409 = vmatprep.subr.mxu0 0.0
    %410 = vmatpush1.msra.mxu0 0.0
    %411 = vmatprep.subr.mxu0 0.0
    %412 = vmatpush1.msra.mxu0 0.0
    %413 = vmatprep.subr.mxu0 0.0
    %414 = vmatpush1.msra.mxu0 0.0
    %415 = vmatprep.subr.mxu0 0.0
    %416 = vmatpush1.msra.mxu0 0.0
    %417 = vmatprep.subr.mxu0 0.0
    %418 = vmatpush1.msra.mxu0 0.0
    %419 = vmatprep.subr.mxu0 0.0
    %420 = vmatpush1.msra.mxu0 0.0
    %421 = vmatprep.subr.mxu0 0.0
    %422 = vmatpush1.msra.mxu0 0.0
    %423 = vmatprep.mubr.f32.mxu0 0.0
    %424 = vmatmul.mubr.f32.gmra.mrb[0].mxu0 %v357
    %v425 = vpop.f32.mrb[0].mxu0
    %v426 = vadd.f32 %v109, %v425
    %v427 = vpop.f32.mrb[0].mxu0
    %428 = vdwg.mxu0
    %v429 = vtanh.pop %v426
    %v431 = vsel %vm205, %v429, 0
    %433 = vmatprep.subr.mxu0 %v45
    %434 = vmatpush1.msra.mxu0 %v44
    %435 = vmatprep.subr.mxu0 %v48
    %436 = vmatpush1.msra.mxu0 %v47
    %437 = vmatprep.subr.mxu0 0.0
    %438 = vmatpush1.msra.mxu0 0.0
    %439 = vmatprep.subr.mxu0 0.0
    %440 = vmatpush1.msra.mxu0 0.0
    %441 = vmatprep.subr.mxu0 0.0
    %442 = vmatpush1.msra.mxu0 0.0
    %443 = vmatprep.subr.mxu0 0.0
    %444 = vmatpush1.msra.mxu0 0.0
    %445 = vmatprep.subr.mxu0 0.0
    %446 = vmatpush1.msra.mxu0 0.0
    %447 = vmatprep.subr.mxu0 0.0
    %448 = vmatpush1.msra.mxu0 0.0
    %449 = vmatprep.subr.mxu0 0.0
    %450 = vmatpush1.msra.mxu0 0.0
    %451 = vmatprep.subr.mxu0 0.0
    %452 = vmatpush1.msra.mxu0 0.0
    %453 = vmatprep.subr.mxu0 0.0
    %454 = vmatpush1.msra.mxu0 0.0
    %455 = vmatprep.subr.mxu0 0.0
    %456 = vmatpush1.msra.mxu0 0.0
    %457 = vmatprep.subr.mxu0 0.0
    %458 = vmatpush1.msra.mxu0 0.0
    %459 = vmatprep.subr.mxu0 0.0
    %460 = vmatpush1.msra.mxu0 0.0
    %461 = vmatprep.subr.mxu0 0.0
    %462 = vmatpush1.msra.mxu0 0.0
    %463 = vmatprep.subr.mxu0 0.0
    %464 = vmatpush1.msra.mxu0 0.0
    %465 = vmatprep.subr.mxu0 0.0
    %466 = vmatpush1.msra.mxu0 0.0
    %467 = vmatprep.subr.mxu0 0.0
    %468 = vmatpush1.msra.mxu0 0.0
    %469 = vmatprep.subr.mxu0 0.0
    %470 = vmatpush1.msra.mxu0 0.0
    %471 = vmatprep.subr.mxu0 0.0
    %472 = vmatpush1.msra.mxu0 0.0
    %473 = vmatprep.subr.mxu0 0.0
    %474 = vmatpush1.msra.mxu0 0.0
    %475 = vmatprep.subr.mxu0 0.0
    %476 = vmatpush1.msra.mxu0 0.0
    %477 = vmatprep.subr.mxu0 0.0
    %478 = vmatpush1.msra.mxu0 0.0
    %479 = vmatprep.subr.mxu0 0.0
    %480 = vmatpush1.msra.mxu0 0.0
    %481 = vmatprep.subr.mxu0 0.0
    %482 = vmatpush1.msra.mxu0 0.0
    %483 = vmatprep.subr.mxu0 0.0
    %484 = vmatpush1.msra.mxu0 0.0
    %485 = vmatprep.subr.mxu0 0.0
    %486 = vmatpush1.msra.mxu0 0.0
    %487 = vmatprep.subr.mxu0 0.0
    %488 = vmatpush1.msra.mxu0 0.0
    %489 = vmatprep.subr.mxu0 0.0
    %490 = vmatpush1.msra.mxu0 0.0
    %491 = vmatprep.subr.mxu0 0.0
    %492 = vmatpush1.msra.mxu0 0.0
    %493 = vmatprep.subr.mxu0 0.0
    %494 = vmatpush1.msra.mxu0 0.0
    %495 = vmatprep.subr.mxu0 0.0
    %496 = vmatpush1.msra.mxu0 0.0
    %497 = vmatprep.mubr.f32.mxu0 0.0
    %498 = vmatmul.mubr.f32.gmra.mrb[0].mxu0 %v431
    %v499 = vpop.f32.mrb[0].mxu0
    %v500 = vadd.f32 %v193, %v499
    %v501 = vpop.f32.mrb[0].mxu0
    %v502 = vadd.f32 %v197, %v501
    %503 = vdwg.mxu0
    %504 = vmatprep.subr.mxu0 0.0
    %505 = vmatpush1.msra.mxu0 %v46
    %506 = vmatprep.subr.mxu0 0.0
    %507 = vmatpush1.msra.mxu0 %v49
    %508 = vmatprep.subr.mxu0 0.0
    %509 = vmatpush1.msra.mxu0 0.0
    %510 = vmatprep.subr.mxu0 0.0
    %511 = vmatpush1.msra.mxu0 0.0
    %512 = vmatprep.subr.mxu0 0.0
    %513 = vmatpush1.msra.mxu0 0.0
    %514 = vmatprep.subr.mxu0 0.0
    %515 = vmatpush1.msra.mxu0 0.0
    %516 = vmatprep.subr.mxu0 0.0
    %517 = vmatpush1.msra.mxu0 0.0
    %518 = vmatprep.subr.mxu0 0.0
    %519 = vmatpush1.msra.mxu0 0.0
    %520 = vmatprep.subr.mxu0 0.0
    %521 = vmatpush1.msra.mxu0 0.0
    %522 = vmatprep.subr.mxu0 0.0
    %523 = vmatpush1.msra.mxu0 0.0
    %524 = vmatprep.subr.mxu0 0.0
    %525 = vmatpush1.msra.mxu0 0.0
    %526 = vmatprep.subr.mxu0 0.0
    %527 = vmatpush1.msra.mxu0 0.0
    %528 = vmatprep.subr.mxu0 0.0
    %529 = vmatpush1.msra.mxu0 0.0
    %530 = vmatprep.subr.mxu0 0.0
    %531 = vmatpush1.msra.mxu0 0.0
    %532 = vmatprep.subr.mxu0 0.0
    %533 = vmatpush1.msra.mxu0 0.0
    %534 = vmatprep.subr.mxu0 0.0
    %535 = vmatpush1.msra.mxu0 0.0
    %536 = vmatprep.subr.mxu0 0.0
    %537 = vmatpush1.msra.mxu0 0.0
    %538 = vmatprep.subr.mxu0 0.0
    %539 = vmatpush1.msra.mxu0 0.0
    %540 = vmatprep.subr.mxu0 0.0
    %541 = vmatpush1.msra.mxu0 0.0
    %542 = vmatprep.subr.mxu0 0.0
    %543 = vmatpush1.msra.mxu0 0.0
    %544 = vmatprep.subr.mxu0 0.0
    %545 = vmatpush1.msra.mxu0 0.0
    %546 = vmatprep.subr.mxu0 0.0
    %547 = vmatpush1.msra.mxu0 0.0
    %548 = vmatprep.subr.mxu0 0.0
    %549 = vmatpush1.msra.mxu0 0.0
    %550 = vmatprep.subr.mxu0 0.0
    %551 = vmatpush1.msra.mxu0 0.0
    %552 = vmatprep.subr.mxu0 0.0
    %553 = vmatpush1.msra.mxu0 0.0
    %554 = vmatprep.subr.mxu0 0.0
    %555 = vmatpush1.msra.mxu0 0.0
    %556 = vmatprep.subr.mxu0 0.0
    %557 = vmatpush1.msra.mxu0 0.0
    %558 = vmatprep.subr.mxu0 0.0
    %559 = vmatpush1.msra.mxu0 0.0
    %560 = vmatprep.subr.mxu0 0.0
    %561 = vmatpush1.msra.mxu0 0.0
    %562 = vmatprep.subr.mxu0 0.0
    %563 = vmatpush1.msra.mxu0 0.0
    %564 = vmatprep.subr.mxu0 0.0
    %565 = vmatpush1.msra.mxu0 0.0
    %566 = vmatprep.subr.mxu0 0.0
    %567 = vmatpush1.msra.mxu0 0.0
    %568 = vmatprep.mubr.f32.mxu0 0.0
    %569 = vmatmul.mubr.f32.gmra.mrb[0].mxu0 %v431
    %v570 = vpop.f32.mrb[0].mxu0
    %v571 = vadd.f32 %v201, %v570
    %v572 = vpop.f32.mrb[0].mxu0
    %573 = vdwg.mxu0
    %v577 = vrot.slane %v500, 7
    %v578 = vrot.slane %v502, 7
    %v579 = vrot.slane %v571, 7
    %vm583 = vcmask 1040384
    %v584 = vsel %vm583, %v276, %v577
    %v585 = vsel %vm583, %v278, %v578
    %v586 = vsel %vm583, %v347, %v579
    %587 = vmatprep.subr.mxu0 %v53
    %588 = vmatpush1.msra.mxu0 %v52
    %589 = vmatprep.subr.mxu0 %v56
    %590 = vmatpush1.msra.mxu0 %v55
    %591 = vmatprep.subr.mxu0 %v59
    %592 = vmatpush1.msra.mxu0 %v58
    %593 = vmatprep.subr.mxu0 %v62
    %594 = vmatpush1.msra.mxu0 %v61
    %595 = vmatprep.subr.mxu0 %v65
    %596 = vmatpush1.msra.mxu0 %v64
    %597 = vmatprep.subr.mxu0 %v68
    %598 = vmatpush1.msra.mxu0 %v67
    %599 = vmatprep.subr.mxu0 %v71
    %600 = vmatpush1.msra.mxu0 %v70
    %601 = vmatprep.subr.mxu0 %v74
    %602 = vmatpush1.msra.mxu0 %v73
    %603 = vmatprep.subr.mxu0 %v77
    %604 = vmatpush1.msra.mxu0 %v76
    %605 = vmatprep.subr.mxu0 %v80
    %606 = vmatpush1.msra.mxu0 %v79
    %607 = vmatprep.subr.mxu0 %v83
    %608 = vmatpush1.msra.mxu0 %v82
    %609 = vmatprep.subr.mxu0 %v86
    %610 = vmatpush1.msra.mxu0 %v85
    %611 = vmatprep.subr.mxu0 %v89
    %612 = vmatpush1.msra.mxu0 %v88
    %613 = vmatprep.subr.mxu0 %v92
    %614 = vmatpush1.msra.mxu0 %v91
    %615 = vmatprep.subr.mxu0 %v95
    %616 = vmatpush1.msra.mxu0 %v94
    %617 = vmatprep.subr.mxu0 %v98
    %618 = vmatpush1.msra.mxu0 %v97
    %619 = vmatprep.subr.mxu0 0.0
    %620 = vmatpush1.msra.mxu0 0.0
    %621 = vmatprep.subr.mxu0 0.0
    %622 = vmatpush1.msra.mxu0 0.0
    %623 = vmatprep.subr.mxu0 0.0
    %624 = vmatpush1.msra.mxu0 0.0
    %625 = vmatprep.subr.mxu0 0.0
    %626 = vmatpush1.msra.mxu0 0.0
    %627 = vmatprep.subr.mxu0 0.0
    %628 = vmatpush1.msra.mxu0 0.0
    %629 = vmatprep.subr.mxu0 0.0
    %630 = vmatpush1.msra.mxu0 0.0
    %631 = vmatprep.subr.mxu0 0.0
    %632 = vmatpush1.msra.mxu0 0.0
    %633 = vmatprep.subr.mxu0 0.0
    %634 = vmatpush1.msra.mxu0 0.0
    %635 = vmatprep.subr.mxu0 0.0
    %636 = vmatpush1.msra.mxu0 0.0
    %637 = vmatprep.subr.mxu0 0.0
    %638 = vmatpush1.msra.mxu0 0.0
    %639 = vmatprep.subr.mxu0 0.0
    %640 = vmatpush1.msra.mxu0 0.0
    %641 = vmatprep.subr.mxu0 0.0
    %642 = vmatpush1.msra.mxu0 0.0
    %643 = vmatprep.subr.mxu0 0.0
    %644 = vmatpush1.msra.mxu0 0.0
    %645 = vmatprep.subr.mxu0 0.0
    %646 = vmatpush1.msra.mxu0 0.0
    %647 = vmatprep.subr.mxu0 0.0
    %648 = vmatpush1.msra.mxu0 0.0
    %649 = vmatprep.subr.mxu0 0.0
    %650 = vmatpush1.msra.mxu0 0.0
    %651 = vmatprep.mubr.f32.mxu0 0.0
    %652 = vmatmul.mubr.f32.gmra.mrb[0].mxu0 0.0
    %v653 = vpop.f32.mrb[0].mxu0
    %v654 = vadd.f32 0.0, %v653
    %v655 = vpop.f32.mrb[0].mxu0
    %v656 = vadd.f32 0.0, %v655
    %657 = vdwg.mxu0
    %658 = vmatprep.subr.mxu0 0.0
    %659 = vmatpush1.msra.mxu0 %v54
    %660 = vmatprep.subr.mxu0 0.0
    %661 = vmatpush1.msra.mxu0 %v57
    %662 = vmatprep.subr.mxu0 0.0
    %663 = vmatpush1.msra.mxu0 %v60
    %664 = vmatprep.subr.mxu0 0.0
    %665 = vmatpush1.msra.mxu0 %v63
    %666 = vmatprep.subr.mxu0 0.0
    %667 = vmatpush1.msra.mxu0 %v66
    %668 = vmatprep.subr.mxu0 0.0
    %669 = vmatpush1.msra.mxu0 %v69
    %670 = vmatprep.subr.mxu0 0.0
    %671 = vmatpush1.msra.mxu0 %v72
    %672 = vmatprep.subr.mxu0 0.0
    %673 = vmatpush1.msra.mxu0 %v75
    %674 = vmatprep.subr.mxu0 0.0
    %675 = vmatpush1.msra.mxu0 %v78
    %676 = vmatprep.subr.mxu0 0.0
    %677 = vmatpush1.msra.mxu0 %v81
    %678 = vmatprep.subr.mxu0 0.0
    %679 = vmatpush1.msra.mxu0 %v84
    %680 = vmatprep.subr.mxu0 0.0
    %681 = vmatpush1.msra.mxu0 %v87
    %682 = vmatprep.subr.mxu0 0.0
    %683 = vmatpush1.msra.mxu0 %v90
    %684 = vmatprep.subr.mxu0 0.0
    %685 = vmatpush1.msra.mxu0 %v93
    %686 = vmatprep.subr.mxu0 0.0
    %687 = vmatpush1.msra.mxu0 %v96
    %688 = vmatprep.subr.mxu0 0.0
    %689 = vmatpush1.msra.mxu0 %v99
    %690 = vmatprep.subr.mxu0 0.0
    %691 = vmatpush1.msra.mxu0 0.0
    %692 = vmatprep.subr.mxu0 0.0
    %693 = vmatpush1.msra.mxu0 0.0
    %694 = vmatprep.subr.mxu0 0.0
    %695 = vmatpush1.msra.mxu0 0.0
    %696 = vmatprep.subr.mxu0 0.0
    %697 = vmatpush1.msra.mxu0 0.0
    %698 = vmatprep.subr.mxu0 0.0
    %699 = vmatpush1.msra.mxu0 0.0
    %700 = vmatprep.subr.mxu0 0.0
    %701 = vmatpush1.msra.mxu0 0.0
    %702 = vmatprep.subr.mxu0 0.0
    %703 = vmatpush1.msra.mxu0 0.0
    %704 = vmatprep.subr.mxu0 0.0
    %705 = vmatpush1.msra.mxu0 0.0
    %706 = vmatprep.subr.mxu0 0.0
    %707 = vmatpush1.msra.mxu0 0.0
    %708 = vmatprep.subr.mxu0 0.0
    %709 = vmatpush1.msra.mxu0 0.0
    %710 = vmatprep.subr.mxu0 0.0
    %711 = vmatpush1.msra.mxu0 0.0
    %712 = vmatprep.subr.mxu0 0.0
    %713 = vmatpush1.msra.mxu0 0.0
    %714 = vmatprep.subr.mxu0 0.0
    %715 = vmatpush1.msra.mxu0 0.0
    %716 = vmatprep.subr.mxu0 0.0
    %717 = vmatpush1.msra.mxu0 0.0
    %718 = vmatprep.subr.mxu0 0.0
    %719 = vmatpush1.msra.mxu0 0.0
    %720 = vmatprep.subr.mxu0 0.0
    %721 = vmatpush1.msra.mxu0 0.0
    %722 = vmatprep.mubr.f32.mxu0 0.0
    %723 = vmatmul.mubr.f32.gmra.mrb[0].mxu0 0.0
    %v724 = vpop.f32.mrb[0].mxu0
    %v725 = vadd.f32 0.0, %v724
    %v726 = vpop.f32.mrb[0].mxu0
    %727 = vdwg.mxu0
    %v728 = vadd.f32 %v584, %v654
    %v729 = vadd.f32 %v585, %v656
    %v730 = vxor.u32 %v728, 2147483648
    %v731 = vxor.u32 %v729, 2147483648
    %v732 = vmul.f32 %v730, 1.442695
    %v733 = vpow.pop %v732
    %v734 = vmul.f32 %v731, 1.442695
    %v735 = vpow.pop %v734
    %v736 = vadd.f32 %v733, 1.0
    %v737 = vadd.f32 %v735, 1.0
    %v738 = vrcp.pop %v736
    %v739 = vmul.f32 1.0, %v738
    %v740 = vrcp.pop %v737
    %v741 = vmul.f32 1.0, %v740
    %v742 = vadd.f32 %v725, %v100
    %v743 = vmul.f32 %v739, %v742
    %v744 = vadd.f32 %v586, %v743
    %v745 = vtanh.pop %v744
    %v746 = vsub.f32 1.0, %v741
    %v747 = vmul.f32 %v746, %v745
    %v748 = vmul.f32 %v741, 0.0
    %v749 = vadd.f32 %v747, %v748
    %v753 = vrot.slane %v276, 1
    %v754 = vrot.slane %v278, 1
    %v755 = vrot.slane %v347, 1
    %v759 = vsel %vm583, %v753, %v500
    %v760 = vsel %vm583, %v754, %v502
    %v761 = vsel %vm583, %v755, %v571
    %762 = vmatprep.subr.mxu0 %v53
    %763 = vmatpush1.msra.mxu0 %v52
    %764 = vmatprep.subr.mxu0 %v56
    %765 = vmatpush1.msra.mxu0 %v55
    %766 = vmatprep.subr.mxu0 %v59
    %767 = vmatpush1.msra.mxu0 %v58
    %768 = vmatprep.subr.mxu0 %v62
    %769 = vmatpush1.msra.mxu0 %v61
    %770 = vmatprep.subr.mxu0 %v65
    %771 = vmatpush1.msra.mxu0 %v64
    %772 = vmatprep.subr.mxu0 %v68
    %773 = vmatpush1.msra.mxu0 %v67
    %774 = vmatprep.subr.mxu0 %v71
    %775 = vmatpush1.msra.mxu0 %v70
    %776 = vmatprep.subr.mxu0 %v74
    %777 = vmatpush1.msra.mxu0 %v73
    %778 = vmatprep.subr.mxu0 %v77
    %779 = vmatpush1.msra.mxu0 %v76
    %780 = vmatprep.subr.mxu0 %v80
    %781 = vmatpush1.msra.mxu0 %v79
    %782 = vmatprep.subr.mxu0 %v83
    %783 = vmatpush1.msra.mxu0 %v82
    %784 = vmatprep.subr.mxu0 %v86
    %785 = vmatpush1.msra.mxu0 %v85
    %786 = vmatprep.subr.mxu0 %v89
    %787 = vmatpush1.msra.mxu0 %v88
    %788 = vmatprep.subr.mxu0 %v92
    %789 = vmatpush1.msra.mxu0 %v91
    %790 = vmatprep.subr.mxu0 %v95
    %791 = vmatpush1.msra.mxu0 %v94
    %792 = vmatprep.subr.mxu0 %v98
    %793 = vmatpush1.msra.mxu0 %v97
    %794 = vmatprep.subr.mxu0 0.0
    %795 = vmatpush1.msra.mxu0 0.0
    %796 = vmatprep.subr.mxu0 0.0
    %797 = vmatpush1.msra.mxu0 0.0
    %798 = vmatprep.subr.mxu0 0.0
    %799 = vmatpush1.msra.mxu0 0.0
    %800 = vmatprep.subr.mxu0 0.0
    %801 = vmatpush1.msra.mxu0 0.0
    %802 = vmatprep.subr.mxu0 0.0
    %803 = vmatpush1.msra.mxu0 0.0
    %804 = vmatprep.subr.mxu0 0.0
    %805 = vmatpush1.msra.mxu0 0.0
    %806 = vmatprep.subr.mxu0 0.0
    %807 = vmatpush1.msra.mxu0 0.0
    %808 = vmatprep.subr.mxu0 0.0
    %809 = vmatpush1.msra.mxu0 0.0
    %810 = vmatprep.subr.mxu0 0.0
    %811 = vmatpush1.msra.mxu0 0.0
    %812 = vmatprep.subr.mxu0 0.0
    %813 = vmatpush1.msra.mxu0 0.0
    %814 = vmatprep.subr.mxu0 0.0
    %815 = vmatpush1.msra.mxu0 0.0
    %816 = vmatprep.subr.mxu0 0.0
    %817 = vmatpush1.msra.mxu0 0.0
    %818 = vmatprep.subr.mxu0 0.0
    %819 = vmatpush1.msra.mxu0 0.0
    %820 = vmatprep.subr.mxu0 0.0
    %821 = vmatpush1.msra.mxu0 0.0
    %822 = vmatprep.subr.mxu0 0.0
    %823 = vmatpush1.msra.mxu0 0.0
    %824 = vmatprep.subr.mxu0 0.0
    %825 = vmatpush1.msra.mxu0 0.0
    %826 = vmatprep.mubr.f32.mxu0 0.0
    %827 = vmatmul.mubr.f32.gmra.mrb[0].mxu0 %v749
    %v828 = vpop.f32.mrb[0].mxu0
    %v829 = vadd.f32 0.0, %v828
    %v830 = vpop.f32.mrb[0].mxu0
    %v831 = vadd.f32 0.0, %v830
    %832 = vdwg.mxu0
    %833 = vmatprep.subr.mxu0 0.0
    %834 = vmatpush1.msra.mxu0 %v54
    %835 = vmatprep.subr.mxu0 0.0
    %836 = vmatpush1.msra.mxu0 %v57
    %837 = vmatprep.subr.mxu0 0.0
    %838 = vmatpush1.msra.mxu0 %v60
    %839 = vmatprep.subr.mxu0 0.0
    %840 = vmatpush1.msra.mxu0 %v63
    %841 = vmatprep.subr.mxu0 0.0
    %842 = vmatpush1.msra.mxu0 %v66
    %843 = vmatprep.subr.mxu0 0.0
    %844 = vmatpush1.msra.mxu0 %v69
    %845 = vmatprep.subr.mxu0 0.0
    %846 = vmatpush1.msra.mxu0 %v72
    %847 = vmatprep.subr.mxu0 0.0
    %848 = vmatpush1.msra.mxu0 %v75
    %849 = vmatprep.subr.mxu0 0.0
    %850 = vmatpush1.msra.mxu0 %v78
    %851 = vmatprep.subr.mxu0 0.0
    %852 = vmatpush1.msra.mxu0 %v81
    %853 = vmatprep.subr.mxu0 0.0
    %854 = vmatpush1.msra.mxu0 %v84
    %855 = vmatprep.subr.mxu0 0.0
    %856 = vmatpush1.msra.mxu0 %v87
    %857 = vmatprep.subr.mxu0 0.0
    %858 = vmatpush1.msra.mxu0 %v90
    %859 = vmatprep.subr.mxu0 0.0
    %860 = vmatpush1.msra.mxu0 %v93
    %861 = vmatprep.subr.mxu0 0.0
    %862 = vmatpush1.msra.mxu0 %v96
    %863 = vmatprep.subr.mxu0 0.0
    %864 = vmatpush1.msra.mxu0 %v99
    %865 = vmatprep.subr.mxu0 0.0
    %866 = vmatpush1.msra.mxu0 0.0
    %867 = vmatprep.subr.mxu0 0.0
    %868 = vmatpush1.msra.mxu0 0.0
    %869 = vmatprep.subr.mxu0 0.0
    %870 = vmatpush1.msra.mxu0 0.0
    %871 = vmatprep.subr.mxu0 0.0
    %872 = vmatpush1.msra.mxu0 0.0
    %873 = vmatprep.subr.mxu0 0.0
    %874 = vmatpush1.msra.mxu0 0.0
    %875 = vmatprep.subr.mxu0 0.0
    %876 = vmatpush1.msra.mxu0 0.0
    %877 = vmatprep.subr.mxu0 0.0
    %878 = vmatpush1.msra.mxu0 0.0
    %879 = vmatprep.subr.mxu0 0.0
    %880 = vmatpush1.msra.mxu0 0.0
    %881 = vmatprep.subr.mxu0 0.0
    %882 = vmatpush1.msra.mxu0 0.0
    %883 = vmatprep.subr.mxu0 0.0
    %884 = vmatpush1.msra.mxu0 0.0
    %885 = vmatprep.subr.mxu0 0.0
    %886 = vmatpush1.msra.mxu0 0.0
    %887 = vmatprep.subr.mxu0 0.0
    %888 = vmatpush1.msra.mxu0 0.0
    %889 = vmatprep.subr.mxu0 0.0
    %890 = vmatpush1.msra.mxu0 0.0
    %891 = vmatprep.subr.mxu0 0.0
    %892 = vmatpush1.msra.mxu0 0.0
    %893 = vmatprep.subr.mxu0 0.0
    %894 = vmatpush1.msra.mxu0 0.0
    %895 = vmatprep.subr.mxu0 0.0
    %896 = vmatpush1.msra.mxu0 0.0
    %897 = vmatprep.mubr.f32.mxu0 0.0
    %898 = vmatmul.mubr.f32.gmra.mrb[0].mxu0 %v749
    %v899 = vpop.f32.mrb[0].mxu0
    %v900 = vadd.f32 0.0, %v899
    %v901 = vpop.f32.mrb[0].mxu0
    %902 = vdwg.mxu0
    %v903 = vadd.f32 %v759, %v829
    %v904 = vadd.f32 %v760, %v831
    %v905 = vxor.u32 %v903, 2147483648
    %v906 = vxor.u32 %v904, 2147483648
    %v907 = vmul.f32 %v905, 1.442695
    %v908 = vpow.pop %v907
    %v909 = vmul.f32 %v906, 1.442695
    %v910 = vpow.pop %v909
    %v911 = vadd.f32 %v908, 1.0
    %v912 = vadd.f32 %v910, 1.0
    %v913 = vrcp.pop %v911
    %v914 = vmul.f32 1.0, %v913
    %v915 = vrcp.pop %v912
    %v916 = vmul.f32 1.0, %v915
    %v917 = vadd.f32 %v900, %v100
    %v918 = vmul.f32 %v914, %v917
    %v919 = vadd.f32 %v761, %v918
    %v920 = vtanh.pop %v919
    %v921 = vsub.f32 1.0, %v916
    %v922 = vmul.f32 %v921, %v920
    %v923 = vmul.f32 %v916, %v749
    %v924 = vadd.f32 %v922, %v923
    %v925 = vrot.slane %v276, 2
    %v926 = vrot.slane %v278, 2
    %v927 = vrot.slane %v347, 2
    %v931 = vrot.slane %v500, 1
    %v932 = vrot.slane %v502, 1
    %v933 = vrot.slane %v571, 1
    %v937 = vsel %vm583, %v925, %v931
    %v938 = vsel %vm583, %v926, %v932
    %v939 = vsel %vm583, %v927, %v933
    %940 = vmatprep.subr.mxu0 %v53
    %941 = vmatpush1.msra.mxu0 %v52
    %942 = vmatprep.subr.mxu0 %v56
    %943 = vmatpush1.msra.mxu0 %v55
    %944 = vmatprep.subr.mxu0 %v59
    %945 = vmatpush1.msra.mxu0 %v58
    %946 = vmatprep.subr.mxu0 %v62
    %947 = vmatpush1.msra.mxu0 %v61
    %948 = vmatprep.subr.mxu0 %v65
    %949 = vmatpush1.msra.mxu0 %v64
    %950 = vmatprep.subr.mxu0 %v68
    %951 = vmatpush1.msra.mxu0 %v67
    %952 = vmatprep.subr.mxu0 %v71
    %953 = vmatpush1.msra.mxu0 %v70
    %954 = vmatprep.subr.mxu0 %v74
    %955 = vmatpush1.msra.mxu0 %v73
    %956 = vmatprep.subr.mxu0 %v77
    %957 = vmatpush1.msra.mxu0 %v76
    %958 = vmatprep.subr.mxu0 %v80
    %959 = vmatpush1.msra.mxu0 %v79
    %960 = vmatprep.subr.mxu0 %v83
    %961 = vmatpush1.msra.mxu0 %v82
    %962 = vmatprep.subr.mxu0 %v86
    %963 = vmatpush1.msra.mxu0 %v85
    %964 = vmatprep.subr.mxu0 %v89
    %965 = vmatpush1.msra.mxu0 %v88
    %966 = vmatprep.subr.mxu0 %v92
    %967 = vmatpush1.msra.mxu0 %v91
    %968 = vmatprep.subr.mxu0 %v95
    %969 = vmatpush1.msra.mxu0 %v94
    %970 = vmatprep.subr.mxu0 %v98
    %971 = vmatpush1.msra.mxu0 %v97
    %972 = vmatprep.subr.mxu0 0.0
    %973 = vmatpush1.msra.mxu0 0.0
    %974 = vmatprep.subr.mxu0 0.0
    %975 = vmatpush1.msra.mxu0 0.0
    %976 = vmatprep.subr.mxu0 0.0
    %977 = vmatpush1.msra.mxu0 0.0
    %978 = vmatprep.subr.mxu0 0.0
    %979 = vmatpush1.msra.mxu0 0.0
    %980 = vmatprep.subr.mxu0 0.0
    %981 = vmatpush1.msra.mxu0 0.0
    %982 = vmatprep.subr.mxu0 0.0
    %983 = vmatpush1.msra.mxu0 0.0
    %984 = vmatprep.subr.mxu0 0.0
    %985 = vmatpush1.msra.mxu0 0.0
    %986 = vmatprep.subr.mxu0 0.0
    %987 = vmatpush1.msra.mxu0 0.0
    %988 = vmatprep.subr.mxu0 0.0
    %989 = vmatpush1.msra.mxu0 0.0
    %990 = vmatprep.subr.mxu0 0.0
    %991 = vmatpush1.msra.mxu0 0.0
    %992 = vmatprep.subr.mxu0 0.0
    %993 = vmatpush1.msra.mxu0 0.0
    %994 = vmatprep.subr.mxu0 0.0
    %995 = vmatpush1.msra.mxu0 0.0
    %996 = vmatprep.subr.mxu0 0.0
    %997 = vmatpush1.msra.mxu0 0.0
    %998 = vmatprep.subr.mxu0 0.0
    %999 = vmatpush1.msra.mxu0 0.0
    %1000 = vmatprep.subr.mxu0 0.0
    %1001 = vmatpush1.msra.mxu0 0.0
    %1002 = vmatprep.subr.mxu0 0.0
    %1003 = vmatpush1.msra.mxu0 0.0
    %1004 = vmatprep.mubr.f32.mxu0 0.0
    %1005 = vmatmul.mubr.f32.gmra.mrb[0].mxu0 %v924
    %v1006 = vpop.f32.mrb[0].mxu0
    %v1007 = vadd.f32 0.0, %v1006
    %v1008 = vpop.f32.mrb[0].mxu0
    %v1009 = vadd.f32 0.0, %v1008
    %1010 = vdwg.mxu0
    %1011 = vmatprep.subr.mxu0 0.0
    %1012 = vmatpush1.msra.mxu0 %v54
    %1013 = vmatprep.subr.mxu0 0.0
    %1014 = vmatpush1.msra.mxu0 %v57
    %1015 = vmatprep.subr.mxu0 0.0
    %1016 = vmatpush1.msra.mxu0 %v60
    %1017 = vmatprep.subr.mxu0 0.0
    %1018 = vmatpush1.msra.mxu0 %v63
    %1019 = vmatprep.subr.mxu0 0.0
    %1020 = vmatpush1.msra.mxu0 %v66
    %1021 = vmatprep.subr.mxu0 0.0
    %1022 = vmatpush1.msra.mxu0 %v69
    %1023 = vmatprep.subr.mxu0 0.0
    %1024 = vmatpush1.msra.mxu0 %v72
    %1025 = vmatprep.subr.mxu0 0.0
    %1026 = vmatpush1.msra.mxu0 %v75
    %1027 = vmatprep.subr.mxu0 0.0
    %1028 = vmatpush1.msra.mxu0 %v78
    %1029 = vmatprep.subr.mxu0 0.0
    %1030 = vmatpush1.msra.mxu0 %v81
    %1031 = vmatprep.subr.mxu0 0.0
    %1032 = vmatpush1.msra.mxu0 %v84
    %1033 = vmatprep.subr.mxu0 0.0
    %1034 = vmatpush1.msra.mxu0 %v87
    %1035 = vmatprep.subr.mxu0 0.0
    %1036 = vmatpush1.msra.mxu0 %v90
    %1037 = vmatprep.subr.mxu0 0.0
    %1038 = vmatpush1.msra.mxu0 %v93
    %1039 = vmatprep.subr.mxu0 0.0
    %1040 = vmatpush1.msra.mxu0 %v96
    %1041 = vmatprep.subr.mxu0 0.0
    %1042 = vmatpush1.msra.mxu0 %v99
    %1043 = vmatprep.subr.mxu0 0.0
    %1044 = vmatpush1.msra.mxu0 0.0
    %1045 = vmatprep.subr.mxu0 0.0
    %1046 = vmatpush1.msra.mxu0 0.0
    %1047 = vmatprep.subr.mxu0 0.0
    %1048 = vmatpush1.msra.mxu0 0.0
    %1049 = vmatprep.subr.mxu0 0.0
    %1050 = vmatpush1.msra.mxu0 0.0
    %1051 = vmatprep.subr.mxu0 0.0
    %1052 = vmatpush1.msra.mxu0 0.0
    %1053 = vmatprep.subr.mxu0 0.0
    %1054 = vmatpush1.msra.mxu0 0.0
    %1055 = vmatprep.subr.mxu0 0.0
    %1056 = vmatpush1.msra.mxu0 0.0
    %1057 = vmatprep.subr.mxu0 0.0
    %1058 = vmatpush1.msra.mxu0 0.0
    %1059 = vmatprep.subr.mxu0 0.0
    %1060 = vmatpush1.msra.mxu0 0.0
    %1061 = vmatprep.subr.mxu0 0.0
    %1062 = vmatpush1.msra.mxu0 0.0
    %1063 = vmatprep.subr.mxu0 0.0
    %1064 = vmatpush1.msra.mxu0 0.0
    %1065 = vmatprep.subr.mxu0 0.0
    %1066 = vmatpush1.msra.mxu0 0.0
    %1067 = vmatprep.subr.mxu0 0.0
    %1068 = vmatpush1.msra.mxu0 0.0
    %1069 = vmatprep.subr.mxu0 0.0
    %1070 = vmatpush1.msra.mxu0 0.0
    %1071 = vmatprep.subr.mxu0 0.0
    %1072 = vmatpush1.msra.mxu0 0.0
    %1073 = vmatprep.subr.mxu0 0.0
    %1074 = vmatpush1.msra.mxu0 0.0
    %1075 = vmatprep.mubr.f32.mxu0 0.0
    %1076 = vmatmul.mubr.f32.gmra.mrb[0].mxu0 %v924
    %v1077 = vpop.f32.mrb[0].mxu0
    %v1078 = vadd.f32 0.0, %v1077
    %v1079 = vpop.f32.mrb[0].mxu0
    %1080 = vdwg.mxu0
    %v1081 = vadd.f32 %v937, %v1007
    %v1082 = vadd.f32 %v938, %v1009
    %v1083 = vxor.u32 %v1081, 2147483648
    %v1084 = vxor.u32 %v1082, 2147483648
    %v1085 = vmul.f32 %v1083, 1.442695
    %v1086 = vpow.pop %v1085
    %v1087 = vmul.f32 %v1084, 1.442695
    %v1088 = vpow.pop %v1087
    %v1089 = vadd.f32 %v1086, 1.0
    %v1090 = vadd.f32 %v1088, 1.0
    %v1091 = vrcp.pop %v1089
    %v1092 = vmul.f32 1.0, %v1091
    %v1093 = vrcp.pop %v1090
    %v1094 = vmul.f32 1.0, %v1093
    %v1095 = vadd.f32 %v1078, %v100
    %v1096 = vmul.f32 %v1092, %v1095
    %v1097 = vadd.f32 %v939, %v1096
    %v1098 = vtanh.pop %v1097
    %v1099 = vsub.f32 1.0, %v1094
    %v1100 = vmul.f32 %v1099, %v1098
    %v1101 = vmul.f32 %v1094, %v924
    %v1102 = vadd.f32 %v1100, %v1101
    %v1103 = vrot.slane %v276, 3
    %v1104 = vrot.slane %v278, 3
    %v1105 = vrot.slane %v347, 3
    %v1109 = vrot.slane %v500, 2
    %v1110 = vrot.slane %v502, 2
    %v1111 = vrot.slane %v571, 2
    %v1115 = vsel %vm583, %v1103, %v1109
    %v1116 = vsel %vm583, %v1104, %v1110
    %v1117 = vsel %vm583, %v1105, %v1111
    %1118 = vmatprep.subr.mxu0 %v53
    %1119 = vmatpush1.msra.mxu0 %v52
    %1120 = vmatprep.subr.mxu0 %v56
    %1121 = vmatpush1.msra.mxu0 %v55
    %1122 = vmatprep.subr.mxu0 %v59
    %1123 = vmatpush1.msra.mxu0 %v58
    %1124 = vmatprep.subr.mxu0 %v62
    %1125 = vmatpush1.msra.mxu0 %v61
    %1126 = vmatprep.subr.mxu0 %v65
    %1127 = vmatpush1.msra.mxu0 %v64
    %1128 = vmatprep.subr.mxu0 %v68
    %1129 = vmatpush1.msra.mxu0 %v67
    %1130 = vmatprep.subr.mxu0 %v71
    %1131 = vmatpush1.msra.mxu0 %v70
    %1132 = vmatprep.subr.mxu0 %v74
    %1133 = vmatpush1.msra.mxu0 %v73
    %1134 = vmatprep.subr.mxu0 %v77
    %1135 = vmatpush1.msra.mxu0 %v76
    %1136 = vmatprep.subr.mxu0 %v80
    %1137 = vmatpush1.msra.mxu0 %v79
    %1138 = vmatprep.subr.mxu0 %v83
    %1139 = vmatpush1.msra.mxu0 %v82
    %1140 = vmatprep.subr.mxu0 %v86
    %1141 = vmatpush1.msra.mxu0 %v85
    %1142 = vmatprep.subr.mxu0 %v89
    %1143 = vmatpush1.msra.mxu0 %v88
    %1144 = vmatprep.subr.mxu0 %v92
    %1145 = vmatpush1.msra.mxu0 %v91
    %1146 = vmatprep.subr.mxu0 %v95
    %1147 = vmatpush1.msra.mxu0 %v94
    %1148 = vmatprep.subr.mxu0 %v98
    %1149 = vmatpush1.msra.mxu0 %v97
    %1150 = vmatprep.subr.mxu0 0.0
    %1151 = vmatpush1.msra.mxu0 0.0
    %1152 = vmatprep.subr.mxu0 0.0
    %1153 = vmatpush1.msra.mxu0 0.0
    %1154 = vmatprep.subr.mxu0 0.0
    %1155 = vmatpush1.msra.mxu0 0.0
    %1156 = vmatprep.subr.mxu0 0.0
    %1157 = vmatpush1.msra.mxu0 0.0
    %1158 = vmatprep.subr.mxu0 0.0
    %1159 = vmatpush1.msra.mxu0 0.0
    %1160 = vmatprep.subr.mxu0 0.0
    %1161 = vmatpush1.msra.mxu0 0.0
    %1162 = vmatprep.subr.mxu0 0.0
    %1163 = vmatpush1.msra.mxu0 0.0
    %1164 = vmatprep.subr.mxu0 0.0
    %1165 = vmatpush1.msra.mxu0 0.0
    %1166 = vmatprep.subr.mxu0 0.0
    %1167 = vmatpush1.msra.mxu0 0.0
    %1168 = vmatprep.subr.mxu0 0.0
    %1169 = vmatpush1.msra.mxu0 0.0
    %1170 = vmatprep.subr.mxu0 0.0
    %1171 = vmatpush1.msra.mxu0 0.0
    %1172 = vmatprep.subr.mxu0 0.0
    %1173 = vmatpush1.msra.mxu0 0.0
    %1174 = vmatprep.subr.mxu0 0.0
    %1175 = vmatpush1.msra.mxu0 0.0
    %1176 = vmatprep.subr.mxu0 0.0
    %1177 = vmatpush1.msra.mxu0 0.0
    %1178 = vmatprep.subr.mxu0 0.0
    %1179 = vmatpush1.msra.mxu0 0.0
    %1180 = vmatprep.subr.mxu0 0.0
    %1181 = vmatpush1.msra.mxu0 0.0
    %1182 = vmatprep.mubr.f32.mxu0 0.0
    %1183 = vmatmul.mubr.f32.gmra.mrb[0].mxu0 %v1102
    %v1184 = vpop.f32.mrb[0].mxu0
    %v1185 = vadd.f32 0.0, %v1184
    %v1186 = vpop.f32.mrb[0].mxu0
    %v1187 = vadd.f32 0.0, %v1186
    %1188 = vdwg.mxu0
    %1189 = vmatprep.subr.mxu0 0.0
    %1190 = vmatpush1.msra.mxu0 %v54
    %1191 = vmatprep.subr.mxu0 0.0
    %1192 = vmatpush1.msra.mxu0 %v57
    %1193 = vmatprep.subr.mxu0 0.0
    %1194 = vmatpush1.msra.mxu0 %v60
    %1195 = vmatprep.subr.mxu0 0.0
    %1196 = vmatpush1.msra.mxu0 %v63
    %1197 = vmatprep.subr.mxu0 0.0
    %1198 = vmatpush1.msra.mxu0 %v66
    %1199 = vmatprep.subr.mxu0 0.0
    %1200 = vmatpush1.msra.mxu0 %v69
    %1201 = vmatprep.subr.mxu0 0.0
    %1202 = vmatpush1.msra.mxu0 %v72
    %1203 = vmatprep.subr.mxu0 0.0
    %1204 = vmatpush1.msra.mxu0 %v75
    %1205 = vmatprep.subr.mxu0 0.0
    %1206 = vmatpush1.msra.mxu0 %v78
    %1207 = vmatprep.subr.mxu0 0.0
    %1208 = vmatpush1.msra.mxu0 %v81
    %1209 = vmatprep.subr.mxu0 0.0
    %1210 = vmatpush1.msra.mxu0 %v84
    %1211 = vmatprep.subr.mxu0 0.0
    %1212 = vmatpush1.msra.mxu0 %v87
    %1213 = vmatprep.subr.mxu0 0.0
    %1214 = vmatpush1.msra.mxu0 %v90
    %1215 = vmatprep.subr.mxu0 0.0
    %1216 = vmatpush1.msra.mxu0 %v93
    %1217 = vmatprep.subr.mxu0 0.0
    %1218 = vmatpush1.msra.mxu0 %v96
    %1219 = vmatprep.subr.mxu0 0.0
    %1220 = vmatpush1.msra.mxu0 %v99
    %1221 = vmatprep.subr.mxu0 0.0
    %1222 = vmatpush1.msra.mxu0 0.0
    %1223 = vmatprep.subr.mxu0 0.0
    %1224 = vmatpush1.msra.mxu0 0.0
    %1225 = vmatprep.subr.mxu0 0.0
    %1226 = vmatpush1.msra.mxu0 0.0
    %1227 = vmatprep.subr.mxu0 0.0
    %1228 = vmatpush1.msra.mxu0 0.0
    %1229 = vmatprep.subr.mxu0 0.0
    %1230 = vmatpush1.msra.mxu0 0.0
    %1231 = vmatprep.subr.mxu0 0.0
    %1232 = vmatpush1.msra.mxu0 0.0
    %1233 = vmatprep.subr.mxu0 0.0
    %1234 = vmatpush1.msra.mxu0 0.0
    %1235 = vmatprep.subr.mxu0 0.0
    %1236 = vmatpush1.msra.mxu0 0.0
    %1237 = vmatprep.subr.mxu0 0.0
    %1238 = vmatpush1.msra.mxu0 0.0
    %1239 = vmatprep.subr.mxu0 0.0
    %1240 = vmatpush1.msra.mxu0 0.0
    %1241 = vmatprep.subr.mxu0 0.0
    %1242 = vmatpush1.msra.mxu0 0.0
    %1243 = vmatprep.subr.mxu0 0.0
    %1244 = vmatpush1.msra.mxu0 0.0
    %1245 = vmatprep.subr.mxu0 0.0
    %1246 = vmatpush1.msra.mxu0 0.0
    %1247 = vmatprep.subr.mxu0 0.0
    %1248 = vmatpush1.msra.mxu0 0.0
    %1249 = vmatprep.subr.mxu0 0.0
    %1250 = vmatpush1.msra.mxu0 0.0
    %1251 = vmatprep.subr.mxu0 0.0
    %1252 = vmatpush1.msra.mxu0 0.0
    %1253 = vmatprep.mubr.f32.mxu0 0.0
    %1254 = vmatmul.mubr.f32.gmra.mrb[0].mxu0 %v1102
    %v1255 = vpop.f32.mrb[0].mxu0
    %v1256 = vadd.f32 0.0, %v1255
    %v1257 = vpop.f32.mrb[0].mxu0
    %1258 = vdwg.mxu0
    %v1259 = vadd.f32 %v1115, %v1185
    %v1260 = vadd.f32 %v1116, %v1187
    %v1261 = vxor.u32 %v1259, 2147483648
    %v1262 = vxor.u32 %v1260, 2147483648
    %v1263 = vmul.f32 %v1261, 1.442695
    %v1264 = vpow.pop %v1263
    %v1265 = vmul.f32 %v1262, 1.442695
    %v1266 = vpow.pop %v1265
    %v1267 = vadd.f32 %v1264, 1.0
    %v1268 = vadd.f32 %v1266, 1.0
    %v1269 = vrcp.pop %v1267
    %v1270 = vmul.f32 1.0, %v1269
    %v1271 = vrcp.pop %v1268
    %v1272 = vmul.f32 1.0, %v1271
    %v1273 = vadd.f32 %v1256, %v100
    %v1274 = vmul.f32 %v1270, %v1273
    %v1275 = vadd.f32 %v1117, %v1274
    %v1276 = vtanh.pop %v1275
    %v1277 = vsub.f32 1.0, %v1272
    %v1278 = vmul.f32 %v1277, %v1276
    %v1279 = vmul.f32 %v1272, %v1102
    %v1280 = vadd.f32 %v1278, %v1279
    %v1281 = vrot.slane %v276, 4
    %v1282 = vrot.slane %v278, 4
    %v1283 = vrot.slane %v347, 4
    %v1287 = vrot.slane %v500, 3
    %v1288 = vrot.slane %v502, 3
    %v1289 = vrot.slane %v571, 3
    %v1293 = vsel %vm583, %v1281, %v1287
    %v1294 = vsel %vm583, %v1282, %v1288
    %v1295 = vsel %vm583, %v1283, %v1289
    %1296 = vmatprep.subr.mxu0 %v53
    %1297 = vmatpush1.msra.mxu0 %v52
    %1298 = vmatprep.subr.mxu0 %v56
    %1299 = vmatpush1.msra.mxu0 %v55
    %1300 = vmatprep.subr.mxu0 %v59
    %1301 = vmatpush1.msra.mxu0 %v58
    %1302 = vmatprep.subr.mxu0 %v62
    %1303 = vmatpush1.msra.mxu0 %v61
    %1304 = vmatprep.subr.mxu0 %v65
    %1305 = vmatpush1.msra.mxu0 %v64
    %1306 = vmatprep.subr.mxu0 %v68
    %1307 = vmatpush1.msra.mxu0 %v67
    %1308 = vmatprep.subr.mxu0 %v71
    %1309 = vmatpush1.msra.mxu0 %v70
    %1310 = vmatprep.subr.mxu0 %v74
    %1311 = vmatpush1.msra.mxu0 %v73
    %1312 = vmatprep.subr.mxu0 %v77
    %1313 = vmatpush1.msra.mxu0 %v76
    %1314 = vmatprep.subr.mxu0 %v80
    %1315 = vmatpush1.msra.mxu0 %v79
    %1316 = vmatprep.subr.mxu0 %v83
    %1317 = vmatpush1.msra.mxu0 %v82
    %1318 = vmatprep.subr.mxu0 %v86
    %1319 = vmatpush1.msra.mxu0 %v85
    %1320 = vmatprep.subr.mxu0 %v89
    %1321 = vmatpush1.msra.mxu0 %v88
    %1322 = vmatprep.subr.mxu0 %v92
    %1323 = vmatpush1.msra.mxu0 %v91
    %1324 = vmatprep.subr.mxu0 %v95
    %1325 = vmatpush1.msra.mxu0 %v94
    %1326 = vmatprep.subr.mxu0 %v98
    %1327 = vmatpush1.msra.mxu0 %v97
    %1328 = vmatprep.subr.mxu0 0.0
    %1329 = vmatpush1.msra.mxu0 0.0
    %1330 = vmatprep.subr.mxu0 0.0
    %1331 = vmatpush1.msra.mxu0 0.0
    %1332 = vmatprep.subr.mxu0 0.0
    %1333 = vmatpush1.msra.mxu0 0.0
    %1334 = vmatprep.subr.mxu0 0.0
    %1335 = vmatpush1.msra.mxu0 0.0
    %1336 = vmatprep.subr.mxu0 0.0
    %1337 = vmatpush1.msra.mxu0 0.0
    %1338 = vmatprep.subr.mxu0 0.0
    %1339 = vmatpush1.msra.mxu0 0.0
    %1340 = vmatprep.subr.mxu0 0.0
    %1341 = vmatpush1.msra.mxu0 0.0
    %1342 = vmatprep.subr.mxu0 0.0
    %1343 = vmatpush1.msra.mxu0 0.0
    %1344 = vmatprep.subr.mxu0 0.0
    %1345 = vmatpush1.msra.mxu0 0.0
    %1346 = vmatprep.subr.mxu0 0.0
    %1347 = vmatpush1.msra.mxu0 0.0
    %1348 = vmatprep.subr.mxu0 0.0
    %1349 = vmatpush1.msra.mxu0 0.0
    %1350 = vmatprep.subr.mxu0 0.0
    %1351 = vmatpush1.msra.mxu0 0.0
    %1352 = vmatprep.subr.mxu0 0.0
    %1353 = vmatpush1.msra.mxu0 0.0
    %1354 = vmatprep.subr.mxu0 0.0
    %1355 = vmatpush1.msra.mxu0 0.0
    %1356 = vmatprep.subr.mxu0 0.0
    %1357 = vmatpush1.msra.mxu0 0.0
    %1358 = vmatprep.subr.mxu0 0.0
    %1359 = vmatpush1.msra.mxu0 0.0
    %1360 = vmatprep.mubr.f32.mxu0 0.0
    %1361 = vmatmul.mubr.f32.gmra.mrb[0].mxu0 %v1280
    %v1362 = vpop.f32.mrb[0].mxu0
    %v1363 = vadd.f32 0.0, %v1362
    %v1364 = vpop.f32.mrb[0].mxu0
    %v1365 = vadd.f32 0.0, %v1364
    %1366 = vdwg.mxu0
    %1367 = vmatprep.subr.mxu0 0.0
    %1368 = vmatpush1.msra.mxu0 %v54
    %1369 = vmatprep.subr.mxu0 0.0
    %1370 = vmatpush1.msra.mxu0 %v57
    %1371 = vmatprep.subr.mxu0 0.0
    %1372 = vmatpush1.msra.mxu0 %v60
    %1373 = vmatprep.subr.mxu0 0.0
    %1374 = vmatpush1.msra.mxu0 %v63
    %1375 = vmatprep.subr.mxu0 0.0
    %1376 = vmatpush1.msra.mxu0 %v66
    %1377 = vmatprep.subr.mxu0 0.0
    %1378 = vmatpush1.msra.mxu0 %v69
    %1379 = vmatprep.subr.mxu0 0.0
    %1380 = vmatpush1.msra.mxu0 %v72
    %1381 = vmatprep.subr.mxu0 0.0
    %1382 = vmatpush1.msra.mxu0 %v75
    %1383 = vmatprep.subr.mxu0 0.0
    %1384 = vmatpush1.msra.mxu0 %v78
    %1385 = vmatprep.subr.mxu0 0.0
    %1386 = vmatpush1.msra.mxu0 %v81
    %1387 = vmatprep.subr.mxu0 0.0
    %1388 = vmatpush1.msra.mxu0 %v84
    %1389 = vmatprep.subr.mxu0 0.0
    %1390 = vmatpush1.msra.mxu0 %v87
    %1391 = vmatprep.subr.mxu0 0.0
    %1392 = vmatpush1.msra.mxu0 %v90
    %1393 = vmatprep.subr.mxu0 0.0
    %1394 = vmatpush1.msra.mxu0 %v93
    %1395 = vmatprep.subr.mxu0 0.0
    %1396 = vmatpush1.msra.mxu0 %v96
    %1397 = vmatprep.subr.mxu0 0.0
    %1398 = vmatpush1.msra.mxu0 %v99
    %1399 = vmatprep.subr.mxu0 0.0
    %1400 = vmatpush1.msra.mxu0 0.0
    %1401 = vmatprep.subr.mxu0 0.0
    %1402 = vmatpush1.msra.mxu0 0.0
    %1403 = vmatprep.subr.mxu0 0.0
    %1404 = vmatpush1.msra.mxu0 0.0
    %1405 = vmatprep.subr.mxu0 0.0
    %1406 = vmatpush1.msra.mxu0 0.0
    %1407 = vmatprep.subr.mxu0 0.0
    %1408 = vmatpush1.msra.mxu0 0.0
    %1409 = vmatprep.subr.mxu0 0.0
    %1410 = vmatpush1.msra.mxu0 0.0
    %1411 = vmatprep.subr.mxu0 0.0
    %1412 = vmatpush1.msra.mxu0 0.0
    %1413 = vmatprep.subr.mxu0 0.0
    %1414 = vmatpush1.msra.mxu0 0.0
    %1415 = vmatprep.subr.mxu0 0.0
    %1416 = vmatpush1.msra.mxu0 0.0
    %1417 = vmatprep.subr.mxu0 0.0
    %1418 = vmatpush1.msra.mxu0 0.0
    %1419 = vmatprep.subr.mxu0 0.0
    %1420 = vmatpush1.msra.mxu0 0.0
    %1421 = vmatprep.subr.mxu0 0.0
    %1422 = vmatpush1.msra.mxu0 0.0
    %1423 = vmatprep.subr.mxu0 0.0
    %1424 = vmatpush1.msra.mxu0 0.0
    %1425 = vmatprep.subr.mxu0 0.0
    %1426 = vmatpush1.msra.mxu0 0.0
    %1427 = vmatprep.subr.mxu0 0.0
    %1428 = vmatpush1.msra.mxu0 0.0
    %1429 = vmatprep.subr.mxu0 0.0
    %1430 = vmatpush1.msra.mxu0 0.0
    %1431 = vmatprep.mubr.f32.mxu0 0.0
    %1432 = vmatmul.mubr.f32.gmra.mrb[0].mxu0 %v1280
    %v1433 = vpop.f32.mrb[0].mxu0
    %v1434 = vadd.f32 0.0, %v1433
    %v1435 = vpop.f32.mrb[0].mxu0
    %1436 = vdwg.mxu0
    %v1437 = vadd.f32 %v1293, %v1363
    %v1438 = vadd.f32 %v1294, %v1365
    %v1439 = vxor.u32 %v1437, 2147483648
    %v1440 = vxor.u32 %v1438, 2147483648
    %v1441 = vmul.f32 %v1439, 1.442695
    %v1442 = vpow.pop %v1441
    %v1443 = vmul.f32 %v1440, 1.442695
    %v1444 = vpow.pop %v1443
    %v1445 = vadd.f32 %v1442, 1.0
    %v1446 = vadd.f32 %v1444, 1.0
    %v1447 = vrcp.pop %v1445
    %v1448 = vmul.f32 1.0, %v1447
    %v1449 = vrcp.pop %v1446
    %v1450 = vmul.f32 1.0, %v1449
    %v1451 = vadd.f32 %v1434, %v100
    %v1452 = vmul.f32 %v1448, %v1451
    %v1453 = vadd.f32 %v1295, %v1452
    %v1454 = vtanh.pop %v1453
    %v1455 = vsub.f32 1.0, %v1450
    %v1456 = vmul.f32 %v1455, %v1454
    %v1457 = vmul.f32 %v1450, %v1280
    %v1458 = vadd.f32 %v1456, %v1457
    %v1459 = vrot.slane %v276, 5
    %v1460 = vrot.slane %v278, 5
    %v1461 = vrot.slane %v347, 5
    %v1465 = vrot.slane %v500, 4
    %v1466 = vrot.slane %v502, 4
    %v1467 = vrot.slane %v571, 4
    %v1471 = vsel %vm583, %v1459, %v1465
    %v1472 = vsel %vm583, %v1460, %v1466
    %v1473 = vsel %vm583, %v1461, %v1467
    %1474 = vmatprep.subr.mxu0 %v53
    %1475 = vmatpush1.msra.mxu0 %v52
    %1476 = vmatprep.subr.mxu0 %v56
    %1477 = vmatpush1.msra.mxu0 %v55
    %1478 = vmatprep.subr.mxu0 %v59
    %1479 = vmatpush1.msra.mxu0 %v58
    %1480 = vmatprep.subr.mxu0 %v62
    %1481 = vmatpush1.msra.mxu0 %v61
    %1482 = vmatprep.subr.mxu0 %v65
    %1483 = vmatpush1.msra.mxu0 %v64
    %1484 = vmatprep.subr.mxu0 %v68
    %1485 = vmatpush1.msra.mxu0 %v67
    %1486 = vmatprep.subr.mxu0 %v71
    %1487 = vmatpush1.msra.mxu0 %v70
    %1488 = vmatprep.subr.mxu0 %v74
    %1489 = vmatpush1.msra.mxu0 %v73
    %1490 = vmatprep.subr.mxu0 %v77
    %1491 = vmatpush1.msra.mxu0 %v76
    %1492 = vmatprep.subr.mxu0 %v80
    %1493 = vmatpush1.msra.mxu0 %v79
    %1494 = vmatprep.subr.mxu0 %v83
    %1495 = vmatpush1.msra.mxu0 %v82
    %1496 = vmatprep.subr.mxu0 %v86
    %1497 = vmatpush1.msra.mxu0 %v85
    %1498 = vmatprep.subr.mxu0 %v89
    %1499 = vmatpush1.msra.mxu0 %v88
    %1500 = vmatprep.subr.mxu0 %v92
    %1501 = vmatpush1.msra.mxu0 %v91
    %1502 = vmatprep.subr.mxu0 %v95
    %1503 = vmatpush1.msra.mxu0 %v94
    %1504 = vmatprep.subr.mxu0 %v98
    %1505 = vmatpush1.msra.mxu0 %v97
    %1506 = vmatprep.subr.mxu0 0.0
    %1507 = vmatpush1.msra.mxu0 0.0
    %1508 = vmatprep.subr.mxu0 0.0
    %1509 = vmatpush1.msra.mxu0 0.0
    %1510 = vmatprep.subr.mxu0 0.0
    %1511 = vmatpush1.msra.mxu0 0.0
    %1512 = vmatprep.subr.mxu0 0.0
    %1513 = vmatpush1.msra.mxu0 0.0
    %1514 = vmatprep.subr.mxu0 0.0
    %1515 = vmatpush1.msra.mxu0 0.0
    %1516 = vmatprep.subr.mxu0 0.0
    %1517 = vmatpush1.msra.mxu0 0.0
    %1518 = vmatprep.subr.mxu0 0.0
    %1519 = vmatpush1.msra.mxu0 0.0
    %1520 = vmatprep.subr.mxu0 0.0
    %1521 = vmatpush1.msra.mxu0 0.0
    %1522 = vmatprep.subr.mxu0 0.0
    %1523 = vmatpush1.msra.mxu0 0.0
    %1524 = vmatprep.subr.mxu0 0.0
    %1525 = vmatpush1.msra.mxu0 0.0
    %1526 = vmatprep.subr.mxu0 0.0
    %1527 = vmatpush1.msra.mxu0 0.0
    %1528 = vmatprep.subr.mxu0 0.0
    %1529 = vmatpush1.msra.mxu0 0.0
    %1530 = vmatprep.subr.mxu0 0.0
    %1531 = vmatpush1.msra.mxu0 0.0
    %1532 = vmatprep.subr.mxu0 0.0
    %1533 = vmatpush1.msra.mxu0 0.0
    %1534 = vmatprep.subr.mxu0 0.0
    %1535 = vmatpush1.msra.mxu0 0.0
    %1536 = vmatprep.subr.mxu0 0.0
    %1537 = vmatpush1.msra.mxu0 0.0
    %1538 = vmatprep.mubr.f32.mxu0 0.0
    %1539 = vmatmul.mubr.f32.gmra.mrb[0].mxu0 %v1458
    %v1540 = vpop.f32.mrb[0].mxu0
    %v1541 = vadd.f32 0.0, %v1540
    %v1542 = vpop.f32.mrb[0].mxu0
    %v1543 = vadd.f32 0.0, %v1542
    %1544 = vdwg.mxu0
    %1545 = vmatprep.subr.mxu0 0.0
    %1546 = vmatpush1.msra.mxu0 %v54
    %1547 = vmatprep.subr.mxu0 0.0
    %1548 = vmatpush1.msra.mxu0 %v57
    %1549 = vmatprep.subr.mxu0 0.0
    %1550 = vmatpush1.msra.mxu0 %v60
    %1551 = vmatprep.subr.mxu0 0.0
    %1552 = vmatpush1.msra.mxu0 %v63
    %1553 = vmatprep.subr.mxu0 0.0
    %1554 = vmatpush1.msra.mxu0 %v66
    %1555 = vmatprep.subr.mxu0 0.0
    %1556 = vmatpush1.msra.mxu0 %v69
    %1557 = vmatprep.subr.mxu0 0.0
    %1558 = vmatpush1.msra.mxu0 %v72
    %1559 = vmatprep.subr.mxu0 0.0
    %1560 = vmatpush1.msra.mxu0 %v75
    %1561 = vmatprep.subr.mxu0 0.0
    %1562 = vmatpush1.msra.mxu0 %v78
    %1563 = vmatprep.subr.mxu0 0.0
    %1564 = vmatpush1.msra.mxu0 %v81
    %1565 = vmatprep.subr.mxu0 0.0
    %1566 = vmatpush1.msra.mxu0 %v84
    %1567 = vmatprep.subr.mxu0 0.0
    %1568 = vmatpush1.msra.mxu0 %v87
    %1569 = vmatprep.subr.mxu0 0.0
    %1570 = vmatpush1.msra.mxu0 %v90
    %1571 = vmatprep.subr.mxu0 0.0
    %1572 = vmatpush1.msra.mxu0 %v93
    %1573 = vmatprep.subr.mxu0 0.0
    %1574 = vmatpush1.msra.mxu0 %v96
    %1575 = vmatprep.subr.mxu0 0.0
    %1576 = vmatpush1.msra.mxu0 %v99
    %1577 = vmatprep.subr.mxu0 0.0
    %1578 = vmatpush1.msra.mxu0 0.0
    %1579 = vmatprep.subr.mxu0 0.0
    %1580 = vmatpush1.msra.mxu0 0.0
    %1581 = vmatprep.subr.mxu0 0.0
    %1582 = vmatpush1.msra.mxu0 0.0
    %1583 = vmatprep.subr.mxu0 0.0
    %1584 = vmatpush1.msra.mxu0 0.0
    %1585 = vmatprep.subr.mxu0 0.0
    %1586 = vmatpush1.msra.mxu0 0.0
    %1587 = vmatprep.subr.mxu0 0.0
    %1588 = vmatpush1.msra.mxu0 0.0
    %1589 = vmatprep.subr.mxu0 0.0
    %1590 = vmatpush1.msra.mxu0 0.0
    %1591 = vmatprep.subr.mxu0 0.0
    %1592 = vmatpush1.msra.mxu0 0.0
    %1593 = vmatprep.subr.mxu0 0.0
    %1594 = vmatpush1.msra.mxu0 0.0
    %1595 = vmatprep.subr.mxu0 0.0
    %1596 = vmatpush1.msra.mxu0 0.0
    %1597 = vmatprep.subr.mxu0 0.0
    %1598 = vmatpush1.msra.mxu0 0.0
    %1599 = vmatprep.subr.mxu0 0.0
    %1600 = vmatpush1.msra.mxu0 0.0
    %1601 = vmatprep.subr.mxu0 0.0
    %1602 = vmatpush1.msra.mxu0 0.0
    %1603 = vmatprep.subr.mxu0 0.0
    %1604 = vmatpush1.msra.mxu0 0.0
    %1605 = vmatprep.subr.mxu0 0.0
    %1606 = vmatpush1.msra.mxu0 0.0
    %1607 = vmatprep.subr.mxu0 0.0
    %1608 = vmatpush1.msra.mxu0 0.0
    %1609 = vmatprep.mubr.f32.mxu0 0.0
    %1610 = vmatmul.mubr.f32.gmra.mrb[0].mxu0 %v1458
    %v1611 = vpop.f32.mrb[0].mxu0
    %v1612 = vadd.f32 0.0, %v1611
    %v1613 = vpop.f32.mrb[0].mxu0
    %1614 = vdwg.mxu0
    %v1615 = vadd.f32 %v1471, %v1541
    %v1616 = vadd.f32 %v1472, %v1543
    %v1617 = vxor.u32 %v1615, 2147483648
    %v1618 = vxor.u32 %v1616, 2147483648
    %v1619 = vmul.f32 %v1617, 1.442695
    %v1620 = vpow.pop %v1619
    %v1621 = vmul.f32 %v1618, 1.442695
    %v1622 = vpow.pop %v1621
    %v1623 = vadd.f32 %v1620, 1.0
    %v1624 = vadd.f32 %v1622, 1.0
    %v1625 = vrcp.pop %v1623
    %v1626 = vmul.f32 1.0, %v1625
    %v1627 = vrcp.pop %v1624
    %v1628 = vmul.f32 1.0, %v1627
    %v1629 = vadd.f32 %v1612, %v100
    %v1630 = vmul.f32 %v1626, %v1629
    %v1631 = vadd.f32 %v1473, %v1630
    %v1632 = vtanh.pop %v1631
    %v1633 = vsub.f32 1.0, %v1628
    %v1634 = vmul.f32 %v1633, %v1632
    %v1635 = vmul.f32 %v1628, %v1458
    %v1636 = vadd.f32 %v1634, %v1635
    %v1637 = vrot.slane %v276, 6
    %v1638 = vrot.slane %v278, 6
    %v1639 = vrot.slane %v347, 6
    %v1643 = vrot.slane %v500, 5
    %v1644 = vrot.slane %v502, 5
    %v1645 = vrot.slane %v571, 5
    %v1649 = vsel %vm583, %v1637, %v1643
    %v1650 = vsel %vm583, %v1638, %v1644
    %v1651 = vsel %vm583, %v1639, %v1645
    %1652 = vmatprep.subr.mxu0 %v53
    %1653 = vmatpush1.msra.mxu0 %v52
    %1654 = vmatprep.subr.mxu0 %v56
    %1655 = vmatpush1.msra.mxu0 %v55
    %1656 = vmatprep.subr.mxu0 %v59
    %1657 = vmatpush1.msra.mxu0 %v58
    %1658 = vmatprep.subr.mxu0 %v62
    %1659 = vmatpush1.msra.mxu0 %v61
    %1660 = vmatprep.subr.mxu0 %v65
    %1661 = vmatpush1.msra.mxu0 %v64
    %1662 = vmatprep.subr.mxu0 %v68
    %1663 = vmatpush1.msra.mxu0 %v67
    %1664 = vmatprep.subr.mxu0 %v71
    %1665 = vmatpush1.msra.mxu0 %v70
    %1666 = vmatprep.subr.mxu0 %v74
    %1667 = vmatpush1.msra.mxu0 %v73
    %1668 = vmatprep.subr.mxu0 %v77
    %1669 = vmatpush1.msra.mxu0 %v76
    %1670 = vmatprep.subr.mxu0 %v80
    %1671 = vmatpush1.msra.mxu0 %v79
    %1672 = vmatprep.subr.mxu0 %v83
    %1673 = vmatpush1.msra.mxu0 %v82
    %1674 = vmatprep.subr.mxu0 %v86
    %1675 = vmatpush1.msra.mxu0 %v85
    %1676 = vmatprep.subr.mxu0 %v89
    %1677 = vmatpush1.msra.mxu0 %v88
    %1678 = vmatprep.subr.mxu0 %v92
    %1679 = vmatpush1.msra.mxu0 %v91
    %1680 = vmatprep.subr.mxu0 %v95
    %1681 = vmatpush1.msra.mxu0 %v94
    %1682 = vmatprep.subr.mxu0 %v98
    %1683 = vmatpush1.msra.mxu0 %v97
    %1684 = vmatprep.subr.mxu0 0.0
    %1685 = vmatpush1.msra.mxu0 0.0
    %1686 = vmatprep.subr.mxu0 0.0
    %1687 = vmatpush1.msra.mxu0 0.0
    %1688 = vmatprep.subr.mxu0 0.0
    %1689 = vmatpush1.msra.mxu0 0.0
    %1690 = vmatprep.subr.mxu0 0.0
    %1691 = vmatpush1.msra.mxu0 0.0
    %1692 = vmatprep.subr.mxu0 0.0
    %1693 = vmatpush1.msra.mxu0 0.0
    %1694 = vmatprep.subr.mxu0 0.0
    %1695 = vmatpush1.msra.mxu0 0.0
    %1696 = vmatprep.subr.mxu0 0.0
    %1697 = vmatpush1.msra.mxu0 0.0
    %1698 = vmatprep.subr.mxu0 0.0
    %1699 = vmatpush1.msra.mxu0 0.0
    %1700 = vmatprep.subr.mxu0 0.0
    %1701 = vmatpush1.msra.mxu0 0.0
    %1702 = vmatprep.subr.mxu0 0.0
    %1703 = vmatpush1.msra.mxu0 0.0
    %1704 = vmatprep.subr.mxu0 0.0
    %1705 = vmatpush1.msra.mxu0 0.0
    %1706 = vmatprep.subr.mxu0 0.0
    %1707 = vmatpush1.msra.mxu0 0.0
    %1708 = vmatprep.subr.mxu0 0.0
    %1709 = vmatpush1.msra.mxu0 0.0
    %1710 = vmatprep.subr.mxu0 0.0
    %1711 = vmatpush1.msra.mxu0 0.0
    %1712 = vmatprep.subr.mxu0 0.0
    %1713 = vmatpush1.msra.mxu0 0.0
    %1714 = vmatprep.subr.mxu0 0.0
    %1715 = vmatpush1.msra.mxu0 0.0
    %1716 = vmatprep.mubr.f32.mxu0 0.0
    %1717 = vmatmul.mubr.f32.gmra.mrb[0].mxu0 %v1636
    %v1718 = vpop.f32.mrb[0].mxu0
    %v1719 = vadd.f32 0.0, %v1718
    %v1720 = vpop.f32.mrb[0].mxu0
    %v1721 = vadd.f32 0.0, %v1720
    %1722 = vdwg.mxu0
    %1723 = vmatprep.subr.mxu0 0.0
    %1724 = vmatpush1.msra.mxu0 %v54
    %1725 = vmatprep.subr.mxu0 0.0
    %1726 = vmatpush1.msra.mxu0 %v57
    %1727 = vmatprep.subr.mxu0 0.0
    %1728 = vmatpush1.msra.mxu0 %v60
    %1729 = vmatprep.subr.mxu0 0.0
    %1730 = vmatpush1.msra.mxu0 %v63
    %1731 = vmatprep.subr.mxu0 0.0
    %1732 = vmatpush1.msra.mxu0 %v66
    %1733 = vmatprep.subr.mxu0 0.0
    %1734 = vmatpush1.msra.mxu0 %v69
    %1735 = vmatprep.subr.mxu0 0.0
    %1736 = vmatpush1.msra.mxu0 %v72
    %1737 = vmatprep.subr.mxu0 0.0
    %1738 = vmatpush1.msra.mxu0 %v75
    %1739 = vmatprep.subr.mxu0 0.0
    %1740 = vmatpush1.msra.mxu0 %v78
    %1741 = vmatprep.subr.mxu0 0.0
    %1742 = vmatpush1.msra.mxu0 %v81
    %1743 = vmatprep.subr.mxu0 0.0
    %1744 = vmatpush1.msra.mxu0 %v84
    %1745 = vmatprep.subr.mxu0 0.0
    %1746 = vmatpush1.msra.mxu0 %v87
    %1747 = vmatprep.subr.mxu0 0.0
    %1748 = vmatpush1.msra.mxu0 %v90
    %1749 = vmatprep.subr.mxu0 0.0
    %1750 = vmatpush1.msra.mxu0 %v93
    %1751 = vmatprep.subr.mxu0 0.0
    %1752 = vmatpush1.msra.mxu0 %v96
    %1753 = vmatprep.subr.mxu0 0.0
    %1754 = vmatpush1.msra.mxu0 %v99
    %1755 = vmatprep.subr.mxu0 0.0
    %1756 = vmatpush1.msra.mxu0 0.0
    %1757 = vmatprep.subr.mxu0 0.0
    %1758 = vmatpush1.msra.mxu0 0.0
    %1759 = vmatprep.subr.mxu0 0.0
    %1760 = vmatpush1.msra.mxu0 0.0
    %1761 = vmatprep.subr.mxu0 0.0
    %1762 = vmatpush1.msra.mxu0 0.0
    %1763 = vmatprep.subr.mxu0 0.0
    %1764 = vmatpush1.msra.mxu0 0.0
    %1765 = vmatprep.subr.mxu0 0.0
    %1766 = vmatpush1.msra.mxu0 0.0
    %1767 = vmatprep.subr.mxu0 0.0
    %1768 = vmatpush1.msra.mxu0 0.0
    %1769 = vmatprep.subr.mxu0 0.0
    %1770 = vmatpush1.msra.mxu0 0.0
    %1771 = vmatprep.subr.mxu0 0.0
    %1772 = vmatpush1.msra.mxu0 0.0
    %1773 = vmatprep.subr.mxu0 0.0
    %1774 = vmatpush1.msra.mxu0 0.0
    %1775 = vmatprep.subr.mxu0 0.0
    %1776 = vmatpush1.msra.mxu0 0.0
    %1777 = vmatprep.subr.mxu0 0.0
    %1778 = vmatpush1.msra.mxu0 0.0
    %1779 = vmatprep.subr.mxu0 0.0
    %1780 = vmatpush1.msra.mxu0 0.0
    %1781 = vmatprep.subr.mxu0 0.0
    %1782 = vmatpush1.msra.mxu0 0.0
    %1783 = vmatprep.subr.mxu0 0.0
    %1784 = vmatpush1.msra.mxu0 0.0
    %1785 = vmatprep.subr.mxu0 0.0
    %1786 = vmatpush1.msra.mxu0 0.0
    %1787 = vmatprep.mubr.f32.mxu0 0.0
    %1788 = vmatmul.mubr.f32.gmra.mrb[0].mxu0 %v1636
    %v1789 = vpop.f32.mrb[0].mxu0
    %v1790 = vadd.f32 0.0, %v1789
    %v1791 = vpop.f32.mrb[0].mxu0
    %1792 = vdwg.mxu0
    %v1793 = vadd.f32 %v1649, %v1719
    %v1794 = vadd.f32 %v1650, %v1721
    %v1795 = vxor.u32 %v1793, 2147483648
    %v1796 = vxor.u32 %v1794, 2147483648
    %v1797 = vmul.f32 %v1795, 1.442695
    %v1798 = vpow.pop %v1797
    %v1799 = vmul.f32 %v1796, 1.442695
    %v1800 = vpow.pop %v1799
    %v1801 = vadd.f32 %v1798, 1.0
    %v1802 = vadd.f32 %v1800, 1.0
    %v1803 = vrcp.pop %v1801
    %v1804 = vmul.f32 1.0, %v1803
    %v1805 = vrcp.pop %v1802
    %v1806 = vmul.f32 1.0, %v1805
    %v1807 = vadd.f32 %v1790, %v100
    %v1808 = vmul.f32 %v1804, %v1807
    %v1809 = vadd.f32 %v1651, %v1808
    %v1810 = vtanh.pop %v1809
    %v1811 = vsub.f32 1.0, %v1806
    %v1812 = vmul.f32 %v1811, %v1810
    %v1813 = vmul.f32 %v1806, %v1636
    %v1814 = vadd.f32 %v1812, %v1813
    %v1815 = vrot.slane %v276, 7
    %v1816 = vrot.slane %v278, 7
    %v1817 = vrot.slane %v347, 7
    %v1821 = vrot.slane %v500, 6
    %v1822 = vrot.slane %v502, 6
    %v1823 = vrot.slane %v571, 6
    %v1827 = vsel %vm583, %v1815, %v1821
    %v1828 = vsel %vm583, %v1816, %v1822
    %v1829 = vsel %vm583, %v1817, %v1823
    %1830 = vmatprep.subr.mxu0 %v53
    %1831 = vmatpush1.msra.mxu0 %v52
    %1832 = vmatprep.subr.mxu0 %v56
    %1833 = vmatpush1.msra.mxu0 %v55
    %1834 = vmatprep.subr.mxu0 %v59
    %1835 = vmatpush1.msra.mxu0 %v58
    %1836 = vmatprep.subr.mxu0 %v62
    %1837 = vmatpush1.msra.mxu0 %v61
    %1838 = vmatprep.subr.mxu0 %v65
    %1839 = vmatpush1.msra.mxu0 %v64
    %1840 = vmatprep.subr.mxu0 %v68
    %1841 = vmatpush1.msra.mxu0 %v67
    %1842 = vmatprep.subr.mxu0 %v71
    %1843 = vmatpush1.msra.mxu0 %v70
    %1844 = vmatprep.subr.mxu0 %v74
    %1845 = vmatpush1.msra.mxu0 %v73
    %1846 = vmatprep.subr.mxu0 %v77
    %1847 = vmatpush1.msra.mxu0 %v76
    %1848 = vmatprep.subr.mxu0 %v80
    %1849 = vmatpush1.msra.mxu0 %v79
    %1850 = vmatprep.subr.mxu0 %v83
    %1851 = vmatpush1.msra.mxu0 %v82
    %1852 = vmatprep.subr.mxu0 %v86
    %1853 = vmatpush1.msra.mxu0 %v85
    %1854 = vmatprep.subr.mxu0 %v89
    %1855 = vmatpush1.msra.mxu0 %v88
    %1856 = vmatprep.subr.mxu0 %v92
    %1857 = vmatpush1.msra.mxu0 %v91
    %1858 = vmatprep.subr.mxu0 %v95
    %1859 = vmatpush1.msra.mxu0 %v94
    %1860 = vmatprep.subr.mxu0 %v98
    %1861 = vmatpush1.msra.mxu0 %v97
    %1862 = vmatprep.subr.mxu0 0.0
    %1863 = vmatpush1.msra.mxu0 0.0
    %1864 = vmatprep.subr.mxu0 0.0
    %1865 = vmatpush1.msra.mxu0 0.0
    %1866 = vmatprep.subr.mxu0 0.0
    %1867 = vmatpush1.msra.mxu0 0.0
    %1868 = vmatprep.subr.mxu0 0.0
    %1869 = vmatpush1.msra.mxu0 0.0
    %1870 = vmatprep.subr.mxu0 0.0
    %1871 = vmatpush1.msra.mxu0 0.0
    %1872 = vmatprep.subr.mxu0 0.0
    %1873 = vmatpush1.msra.mxu0 0.0
    %1874 = vmatprep.subr.mxu0 0.0
    %1875 = vmatpush1.msra.mxu0 0.0
    %1876 = vmatprep.subr.mxu0 0.0
    %1877 = vmatpush1.msra.mxu0 0.0
    %1878 = vmatprep.subr.mxu0 0.0
    %1879 = vmatpush1.msra.mxu0 0.0
    %1880 = vmatprep.subr.mxu0 0.0
    %1881 = vmatpush1.msra.mxu0 0.0
    %1882 = vmatprep.subr.mxu0 0.0
    %1883 = vmatpush1.msra.mxu0 0.0
    %1884 = vmatprep.subr.mxu0 0.0
    %1885 = vmatpush1.msra.mxu0 0.0
    %1886 = vmatprep.subr.mxu0 0.0
    %1887 = vmatpush1.msra.mxu0 0.0
    %1888 = vmatprep.subr.mxu0 0.0
    %1889 = vmatpush1.msra.mxu0 0.0
    %1890 = vmatprep.subr.mxu0 0.0
    %1891 = vmatpush1.msra.mxu0 0.0
    %1892 = vmatprep.subr.mxu0 0.0
    %1893 = vmatpush1.msra.mxu0 0.0
    %1894 = vmatprep.mubr.f32.mxu0 0.0
    %1895 = vmatmul.mubr.f32.gmra.mrb[0].mxu0 %v1814
    %v1896 = vpop.f32.mrb[0].mxu0
    %v1897 = vadd.f32 0.0, %v1896
    %v1898 = vpop.f32.mrb[0].mxu0
    %v1899 = vadd.f32 0.0, %v1898
    %1900 = vdwg.mxu0
    %1901 = vmatprep.subr.mxu0 0.0
    %1902 = vmatpush1.msra.mxu0 %v54
    %1903 = vmatprep.subr.mxu0 0.0
    %1904 = vmatpush1.msra.mxu0 %v57
    %1905 = vmatprep.subr.mxu0 0.0
    %1906 = vmatpush1.msra.mxu0 %v60
    %1907 = vmatprep.subr.mxu0 0.0
    %1908 = vmatpush1.msra.mxu0 %v63
    %1909 = vmatprep.subr.mxu0 0.0
    %1910 = vmatpush1.msra.mxu0 %v66
    %1911 = vmatprep.subr.mxu0 0.0
    %1912 = vmatpush1.msra.mxu0 %v69
    %1913 = vmatprep.subr.mxu0 0.0
    %1914 = vmatpush1.msra.mxu0 %v72
    %1915 = vmatprep.subr.mxu0 0.0
    %1916 = vmatpush1.msra.mxu0 %v75
    %1917 = vmatprep.subr.mxu0 0.0
    %1918 = vmatpush1.msra.mxu0 %v78
    %1919 = vmatprep.subr.mxu0 0.0
    %1920 = vmatpush1.msra.mxu0 %v81
    %1921 = vmatprep.subr.mxu0 0.0
    %1922 = vmatpush1.msra.mxu0 %v84
    %1923 = vmatprep.subr.mxu0 0.0
    %1924 = vmatpush1.msra.mxu0 %v87
    %1925 = vmatprep.subr.mxu0 0.0
    %1926 = vmatpush1.msra.mxu0 %v90
    %1927 = vmatprep.subr.mxu0 0.0
    %1928 = vmatpush1.msra.mxu0 %v93
    %1929 = vmatprep.subr.mxu0 0.0
    %1930 = vmatpush1.msra.mxu0 %v96
    %1931 = vmatprep.subr.mxu0 0.0
    %1932 = vmatpush1.msra.mxu0 %v99
    %1933 = vmatprep.subr.mxu0 0.0
    %1934 = vmatpush1.msra.mxu0 0.0
    %1935 = vmatprep.subr.mxu0 0.0
    %1936 = vmatpush1.msra.mxu0 0.0
    %1937 = vmatprep.subr.mxu0 0.0
    %1938 = vmatpush1.msra.mxu0 0.0
    %1939 = vmatprep.subr.mxu0 0.0
    %1940 = vmatpush1.msra.mxu0 0.0
    %1941 = vmatprep.subr.mxu0 0.0
    %1942 = vmatpush1.msra.mxu0 0.0
    %1943 = vmatprep.subr.mxu0 0.0
    %1944 = vmatpush1.msra.mxu0 0.0
    %1945 = vmatprep.subr.mxu0 0.0
    %1946 = vmatpush1.msra.mxu0 0.0
    %1947 = vmatprep.subr.mxu0 0.0
    %1948 = vmatpush1.msra.mxu0 0.0
    %1949 = vmatprep.subr.mxu0 0.0
    %1950 = vmatpush1.msra.mxu0 0.0
    %1951 = vmatprep.subr.mxu0 0.0
    %1952 = vmatpush1.msra.mxu0 0.0
    %1953 = vmatprep.subr.mxu0 0.0
    %1954 = vmatpush1.msra.mxu0 0.0
    %1955 = vmatprep.subr.mxu0 0.0
    %1956 = vmatpush1.msra.mxu0 0.0
    %1957 = vmatprep.subr.mxu0 0.0
    %1958 = vmatpush1.msra.mxu0 0.0
    %1959 = vmatprep.subr.mxu0 0.0
    %1960 = vmatpush1.msra.mxu0 0.0
    %1961 = vmatprep.subr.mxu0 0.0
    %1962 = vmatpush1.msra.mxu0 0.0
    %1963 = vmatprep.subr.mxu0 0.0
    %1964 = vmatpush1.msra.mxu0 0.0
    %1965 = vmatprep.mubr.f32.mxu0 0.0
    %1966 = vmatmul.mubr.f32.gmra.mrb[0].mxu0 %v1814
    %v1967 = vpop.f32.mrb[0].mxu0
    %v1968 = vadd.f32 0.0, %v1967
    %v1969 = vpop.f32.mrb[0].mxu0
    %1970 = vdwg.mxu0
    %v1971 = vadd.f32 %v1827, %v1897
    %v1972 = vadd.f32 %v1828, %v1899
    %v1973 = vxor.u32 %v1971, 2147483648
    %v1974 = vxor.u32 %v1972, 2147483648
    %v1975 = vmul.f32 %v1973, 1.442695
    %v1976 = vpow.pop %v1975
    %v1977 = vmul.f32 %v1974, 1.442695
    %v1978 = vpow.pop %v1977
    %v1979 = vadd.f32 %v1976, 1.0
    %v1980 = vadd.f32 %v1978, 1.0
    %v1981 = vrcp.pop %v1979
    %v1982 = vmul.f32 1.0, %v1981
    %v1983 = vrcp.pop %v1980
    %v1984 = vmul.f32 1.0, %v1983
    %v1985 = vadd.f32 %v1968, %v100
    %v1986 = vmul.f32 %v1982, %v1985
    %v1987 = vadd.f32 %v1829, %v1986
    %v1988 = vtanh.pop %v1987
    %v1989 = vsub.f32 1.0, %v1984
    %v1990 = vmul.f32 %v1989, %v1988
    %v1991 = vmul.f32 %v1984, %v1814
    %v1992 = vadd.f32 %v1990, %v1991
    %v1993 = vld [vmem:[#allocation4 + $0x10] sm:$0xff]
    %v1994 = vld [vmem:[#allocation4 + $0x18] sm:$0xff]
    %v1995 = vld [vmem:[#allocation4 + $0x20] sm:$0xff]
    %v1996 = vld [vmem:[#allocation4 + $0x28] sm:$0xff]
    %v1997 = vld [vmem:[#allocation4 + $0x30] sm:$0x1]
    %v1998 = vlaneseq
    %v1999 = vshrl.u32 %v1998, 7
    %v2000 = vsub.s32 0, %v1999
    %v2001 = vrot.slane %v1997, %v2000
    %vm2002 = vcmask 261120
    %v2004 = vsel %vm2002, %v1992, 0
    %2006 = vmatprep.subr.mxu0 0.0
    %2007 = vmatpush1.msra.mxu0 %v1993
    %2008 = vmatprep.subr.mxu0 0.0
    %2009 = vmatpush1.msra.mxu0 %v1994
    %2010 = vmatprep.subr.mxu0 0.0
    %2011 = vmatpush1.msra.mxu0 %v1995
    %2012 = vmatprep.subr.mxu0 0.0
    %2013 = vmatpush1.msra.mxu0 %v1996
    %2014 = vmatprep.subr.mxu0 0.0
    %2015 = vmatpush1.msra.mxu0 0.0
    %2016 = vmatprep.subr.mxu0 0.0
    %2017 = vmatpush1.msra.mxu0 0.0
    %2018 = vmatprep.subr.mxu0 0.0
    %2019 = vmatpush1.msra.mxu0 0.0
    %2020 = vmatprep.subr.mxu0 0.0
    %2021 = vmatpush1.msra.mxu0 0.0
    %2022 = vmatprep.subr.mxu0 0.0
    %2023 = vmatpush1.msra.mxu0 0.0
    %2024 = vmatprep.subr.mxu0 0.0
    %2025 = vmatpush1.msra.mxu0 0.0
    %2026 = vmatprep.subr.mxu0 0.0
    %2027 = vmatpush1.msra.mxu0 0.0
    %2028 = vmatprep.subr.mxu0 0.0
    %2029 = vmatpush1.msra.mxu0 0.0
    %2030 = vmatprep.subr.mxu0 0.0
    %2031 = vmatpush1.msra.mxu0 0.0
    %2032 = vmatprep.subr.mxu0 0.0
    %2033 = vmatpush1.msra.mxu0 0.0
    %2034 = vmatprep.subr.mxu0 0.0
    %2035 = vmatpush1.msra.mxu0 0.0
    %2036 = vmatprep.subr.mxu0 0.0
    %2037 = vmatpush1.msra.mxu0 0.0
    %2038 = vmatprep.subr.mxu0 0.0
    %2039 = vmatpush1.msra.mxu0 0.0
    %2040 = vmatprep.subr.mxu0 0.0
    %2041 = vmatpush1.msra.mxu0 0.0
    %2042 = vmatprep.subr.mxu0 0.0
    %2043 = vmatpush1.msra.mxu0 0.0
    %2044 = vmatprep.subr.mxu0 0.0
    %2045 = vmatpush1.msra.mxu0 0.0
    %2046 = vmatprep.subr.mxu0 0.0
    %2047 = vmatpush1.msra.mxu0 0.0
    %2048 = vmatprep.subr.mxu0 0.0
    %2049 = vmatpush1.msra.mxu0 0.0
    %2050 = vmatprep.subr.mxu0 0.0
    %2051 = vmatpush1.msra.mxu0 0.0
    %2052 = vmatprep.subr.mxu0 0.0
    %2053 = vmatpush1.msra.mxu0 0.0
    %2054 = vmatprep.subr.mxu0 0.0
    %2055 = vmatpush1.msra.mxu0 0.0
    %2056 = vmatprep.subr.mxu0 0.0
    %2057 = vmatpush1.msra.mxu0 0.0
    %2058 = vmatprep.subr.mxu0 0.0
    %2059 = vmatpush1.msra.mxu0 0.0
    %2060 = vmatprep.subr.mxu0 0.0
    %2061 = vmatpush1.msra.mxu0 0.0
    %2062 = vmatprep.subr.mxu0 0.0
    %2063 = vmatpush1.msra.mxu0 0.0
    %2064 = vmatprep.subr.mxu0 0.0
    %2065 = vmatpush1.msra.mxu0 0.0
    %2066 = vmatprep.subr.mxu0 0.0
    %2067 = vmatpush1.msra.mxu0 0.0
    %2068 = vmatprep.subr.mxu0 0.0
    %2069 = vmatpush1.msra.mxu0 0.0
    %2070 = vmatprep.mubr.f32.mxu0 0.0
    %2071 = vmatmul.mubr.f32.gmra.mrb[0].mxu0 %v2004
    %v2072 = vpop.f32.mrb[0].mxu0
    %v2073 = vadd.f32 %v2001, %v2072
    %v2074 = vpop.f32.mrb[0].mxu0
    %2075 = vdwg.mxu0
    %v2076 = vmax.f32 %v2073, 0.0
    %v2077 = vld [vmem:[#allocation4 + $0x38] sm:$0xff]
    %v2078 = vld [vmem:[#allocation4 + $0x40] sm:$0xff]
    %v2079 = vld [vmem:[#allocation4 + $0x48] sm:$0xff]
    %v2080 = vld [vmem:[#allocation4 + $0x50] sm:$0xff]
    %v2081 = vld [vmem:[#allocation4 + $0x58] sm:$0x1]
    %v2082 = vlaneseq
    %v2083 = vshrl.u32 %v2082, 7
    %v2084 = vsub.s32 0, %v2083
    %v2085 = vrot.slane %v2081, %v2084
    %v2087 = vsel %vm2002, %v2076, 0
    %2089 = vmatprep.subr.mxu0 0.0
    %2090 = vmatpush1.msra.mxu0 %v2077
    %2091 = vmatprep.subr.mxu0 0.0
    %2092 = vmatpush1.msra.mxu0 %v2078
    %2093 = vmatprep.subr.mxu0 0.0
    %2094 = vmatpush1.msra.mxu0 %v2079
    %2095 = vmatprep.subr.mxu0 0.0
    %2096 = vmatpush1.msra.mxu0 %v2080
    %2097 = vmatprep.subr.mxu0 0.0
    %2098 = vmatpush1.msra.mxu0 0.0
    %2099 = vmatprep.subr.mxu0 0.0
    %2100 = vmatpush1.msra.mxu0 0.0
    %2101 = vmatprep.subr.mxu0 0.0
    %2102 = vmatpush1.msra.mxu0 0.0
    %2103 = vmatprep.subr.mxu0 0.0
    %2104 = vmatpush1.msra.mxu0 0.0
    %2105 = vmatprep.subr.mxu0 0.0
    %2106 = vmatpush1.msra.mxu0 0.0
    %2107 = vmatprep.subr.mxu0 0.0
    %2108 = vmatpush1.msra.mxu0 0.0
    %2109 = vmatprep.subr.mxu0 0.0
    %2110 = vmatpush1.msra.mxu0 0.0
    %2111 = vmatprep.subr.mxu0 0.0
    %2112 = vmatpush1.msra.mxu0 0.0
    %2113 = vmatprep.subr.mxu0 0.0
    %2114 = vmatpush1.msra.mxu0 0.0
    %2115 = vmatprep.subr.mxu0 0.0
    %2116 = vmatpush1.msra.mxu0 0.0
    %2117 = vmatprep.subr.mxu0 0.0
    %2118 = vmatpush1.msra.mxu0 0.0
    %2119 = vmatprep.subr.mxu0 0.0
    %2120 = vmatpush1.msra.mxu0 0.0
    %2121 = vmatprep.subr.mxu0 0.0
    %2122 = vmatpush1.msra.mxu0 0.0
    %2123 = vmatprep.subr.mxu0 0.0
    %2124 = vmatpush1.msra.mxu0 0.0
    %2125 = vmatprep.subr.mxu0 0.0
    %2126 = vmatpush1.msra.mxu0 0.0
    %2127 = vmatprep.subr.mxu0 0.0
    %2128 = vmatpush1.msra.mxu0 0.0
    %2129 = vmatprep.subr.mxu0 0.0
    %2130 = vmatpush1.msra.mxu0 0.0
    %2131 = vmatprep.subr.mxu0 0.0
    %2132 = vmatpush1.msra.mxu0 0.0
    %2133 = vmatprep.subr.mxu0 0.0
    %2134 = vmatpush1.msra.mxu0 0.0
    %2135 = vmatprep.subr.mxu0 0.0
    %2136 = vmatpush1.msra.mxu0 0.0
    %2137 = vmatprep.subr.mxu0 0.0
    %2138 = vmatpush1.msra.mxu0 0.0
    %2139 = vmatprep.subr.mxu0 0.0
    %2140 = vmatpush1.msra.mxu0 0.0
    %2141 = vmatprep.subr.mxu0 0.0
    %2142 = vmatpush1.msra.mxu0 0.0
    %2143 = vmatprep.subr.mxu0 0.0
    %2144 = vmatpush1.msra.mxu0 0.0
    %2145 = vmatprep.subr.mxu0 0.0
    %2146 = vmatpush1.msra.mxu0 0.0
    %2147 = vmatprep.subr.mxu0 0.0
    %2148 = vmatpush1.msra.mxu0 0.0
    %2149 = vmatprep.subr.mxu0 0.0
    %2150 = vmatpush1.msra.mxu0 0.0
    %2151 = vmatprep.subr.mxu0 0.0
    %2152 = vmatpush1.msra.mxu0 0.0
    %2153 = vmatprep.mubr.f32.mxu0 0.0
    %2154 = vmatmul.mubr.f32.gmra.mrb[0].mxu0 %v2087
    %v2155 = vpop.f32.mrb[0].mxu0
    %v2156 = vadd.f32 %v2085, %v2155
    %v2157 = vpop.f32.mrb[0].mxu0
    %2158 = vdwg.mxu0
    %v2159 = vmax.f32 %v2156, 0.0
    %v2160 = vld [vmem:[#allocation4 + $0x60] sm:$0xff]
    %v2161 = vld [vmem:[#allocation4 + $0x68] sm:$0xff]
    %v2162 = vld [vmem:[#allocation4 + $0x70] sm:$0x1]
    %v2163 = vlaneseq
    %v2164 = vshrl.u32 %v2163, 7
    %v2165 = vsub.s32 0, %v2164
    %v2166 = vrot.slane %v2162, %v2165
    %v2168 = vsel %vm205, %v2159, 0
    %2170 = vmatprep.subr.mxu0 0.0
    %2171 = vmatpush1.msra.mxu0 %v2160
    %2172 = vmatprep.subr.mxu0 0.0
    %2173 = vmatpush1.msra.mxu0 %v2161
    %2174 = vmatprep.subr.mxu0 0.0
    %2175 = vmatpush1.msra.mxu0 0.0
    %2176 = vmatprep.subr.mxu0 0.0
    %2177 = vmatpush1.msra.mxu0 0.0
    %2178 = vmatprep.subr.mxu0 0.0
    %2179 = vmatpush1.msra.mxu0 0.0
    %2180 = vmatprep.subr.mxu0 0.0
    %2181 = vmatpush1.msra.mxu0 0.0
    %2182 = vmatprep.subr.mxu0 0.0
    %2183 = vmatpush1.msra.mxu0 0.0
    %2184 = vmatprep.subr.mxu0 0.0
    %2185 = vmatpush1.msra.mxu0 0.0
    %2186 = vmatprep.subr.mxu0 0.0
    %2187 = vmatpush1.msra.mxu0 0.0
    %2188 = vmatprep.subr.mxu0 0.0
    %2189 = vmatpush1.msra.mxu0 0.0
    %2190 = vmatprep.subr.mxu0 0.0
    %2191 = vmatpush1.msra.mxu0 0.0
    %2192 = vmatprep.subr.mxu0 0.0
    %2193 = vmatpush1.msra.mxu0 0.0
    %2194 = vmatprep.subr.mxu0 0.0
    %2195 = vmatpush1.msra.mxu0 0.0
    %2196 = vmatprep.subr.mxu0 0.0
    %2197 = vmatpush1.msra.mxu0 0.0
    %2198 = vmatprep.subr.mxu0 0.0
    %2199 = vmatpush1.msra.mxu0 0.0
    %2200 = vmatprep.subr.mxu0 0.0
    %2201 = vmatpush1.msra.mxu0 0.0
    %2202 = vmatprep.subr.mxu0 0.0
    %2203 = vmatpush1.msra.mxu0 0.0
    %2204 = vmatprep.subr.mxu0 0.0
    %2205 = vmatpush1.msra.mxu0 0.0
    %2206 = vmatprep.subr.mxu0 0.0
    %2207 = vmatpush1.msra.mxu0 0.0
    %2208 = vmatprep.subr.mxu0 0.0
    %2209 = vmatpush1.msra.mxu0 0.0
    %2210 = vmatprep.subr.mxu0 0.0
    %2211 = vmatpush1.msra.mxu0 0.0
    %2212 = vmatprep.subr.mxu0 0.0
    %2213 = vmatpush1.msra.mxu0 0.0
    %2214 = vmatprep.subr.mxu0 0.0
    %2215 = vmatpush1.msra.mxu0 0.0
    %2216 = vmatprep.subr.mxu0 0.0
    %2217 = vmatpush1.msra.mxu0 0.0
    %2218 = vmatprep.subr.mxu0 0.0
    %2219 = vmatpush1.msra.mxu0 0.0
    %2220 = vmatprep.subr.mxu0 0.0
    %2221 = vmatpush1.msra.mxu0 0.0
    %2222 = vmatprep.subr.mxu0 0.0
    %2223 = vmatpush1.msra.mxu0 0.0
    %2224 = vmatprep.subr.mxu0 0.0
    %2225 = vmatpush1.msra.mxu0 0.0
    %2226 = vmatprep.subr.mxu0 0.0
    %2227 = vmatpush1.msra.mxu0 0.0
    %2228 = vmatprep.subr.mxu0 0.0
    %2229 = vmatpush1.msra.mxu0 0.0
    %2230 = vmatprep.subr.mxu0 0.0
    %2231 = vmatpush1.msra.mxu0 0.0
    %2232 = vmatprep.subr.mxu0 0.0
    %2233 = vmatpush1.msra.mxu0 0.0
    %2234 = vmatprep.mubr.f32.mxu0 0.0
    %2235 = vmatmul.mubr.f32.gmra.mrb[0].mxu0 %v2168
    %v2236 = vpop.f32.mrb[0].mxu0
    %v2237 = vadd.f32 %v2166, %v2236
    %v2238 = vpop.f32.mrb[0].mxu0
    %2239 = vdwg.mxu0
    %v2240 = vmax.f32 %v2237, 0.0
    %v2241 = vld [vmem:[#allocation4 + $0x78] sm:$0xff]
    %v2242 = vld [vmem:[#allocation4 + $0x80] sm:$0xff]
    %v2243 = vld [vmem:[#allocation4 + $0x88] sm:$0x1]
    %v2244 = vlaneseq
    %v2245 = vshrl.u32 %v2244, 7
    %v2246 = vsub.s32 0, %v2245
    %v2247 = vrot.slane %v2243, %v2246
    %v2249 = vsel %vm205, %v2240, 0
    %2251 = vmatprep.subr.mxu0 0.0
    %2252 = vmatpush1.msra.mxu0 %v2241
    %2253 = vmatprep.subr.mxu0 0.0
    %2254 = vmatpush1.msra.mxu0 %v2242
    %2255 = vmatprep.subr.mxu0 0.0
    %2256 = vmatpush1.msra.mxu0 0.0
    %2257 = vmatprep.subr.mxu0 0.0
    %2258 = vmatpush1.msra.mxu0 0.0
    %2259 = vmatprep.subr.mxu0 0.0
    %2260 = vmatpush1.msra.mxu0 0.0
    %2261 = vmatprep.subr.mxu0 0.0
    %2262 = vmatpush1.msra.mxu0 0.0
    %2263 = vmatprep.subr.mxu0 0.0
    %2264 = vmatpush1.msra.mxu0 0.0
    %2265 = vmatprep.subr.mxu0 0.0
    %2266 = vmatpush1.msra.mxu0 0.0
    %2267 = vmatprep.subr.mxu0 0.0
    %2268 = vmatpush1.msra.mxu0 0.0
    %2269 = vmatprep.subr.mxu0 0.0
    %2270 = vmatpush1.msra.mxu0 0.0
    %2271 = vmatprep.subr.mxu0 0.0
    %2272 = vmatpush1.msra.mxu0 0.0
    %2273 = vmatprep.subr.mxu0 0.0
    %2274 = vmatpush1.msra.mxu0 0.0
    %2275 = vmatprep.subr.mxu0 0.0
    %2276 = vmatpush1.msra.mxu0 0.0
    %2277 = vmatprep.subr.mxu0 0.0
    %2278 = vmatpush1.msra.mxu0 0.0
    %2279 = vmatprep.subr.mxu0 0.0
    %2280 = vmatpush1.msra.mxu0 0.0
    %2281 = vmatprep.subr.mxu0 0.0
    %2282 = vmatpush1.msra.mxu0 0.0
    %2283 = vmatprep.subr.mxu0 0.0
    %2284 = vmatpush1.msra.mxu0 0.0
    %2285 = vmatprep.subr.mxu0 0.0
    %2286 = vmatpush1.msra.mxu0 0.0
    %2287 = vmatprep.subr.mxu0 0.0
    %2288 = vmatpush1.msra.mxu0 0.0
    %2289 = vmatprep.subr.mxu0 0.0
    %2290 = vmatpush1.msra.mxu0 0.0
    %2291 = vmatprep.subr.mxu0 0.0
    %2292 = vmatpush1.msra.mxu0 0.0
    %2293 = vmatprep.subr.mxu0 0.0
    %2294 = vmatpush1.msra.mxu0 0.0
    %2295 = vmatprep.subr.mxu0 0.0
    %2296 = vmatpush1.msra.mxu0 0.0
    %2297 = vmatprep.subr.mxu0 0.0
    %2298 = vmatpush1.msra.mxu0 0.0
    %2299 = vmatprep.subr.mxu0 0.0
    %2300 = vmatpush1.msra.mxu0 0.0
    %2301 = vmatprep.subr.mxu0 0.0
    %2302 = vmatpush1.msra.mxu0 0.0
    %2303 = vmatprep.subr.mxu0 0.0
    %2304 = vmatpush1.msra.mxu0 0.0
    %2305 = vmatprep.subr.mxu0 0.0
    %2306 = vmatpush1.msra.mxu0 0.0
    %2307 = vmatprep.subr.mxu0 0.0
    %2308 = vmatpush1.msra.mxu0 0.0
    %2309 = vmatprep.subr.mxu0 0.0
    %2310 = vmatpush1.msra.mxu0 0.0
    %2311 = vmatprep.subr.mxu0 0.0
    %2312 = vmatpush1.msra.mxu0 0.0
    %2313 = vmatprep.subr.mxu0 0.0
    %2314 = vmatpush1.msra.mxu0 0.0
    %2315 = vmatprep.mubr.f32.mxu0 0.0
    %2316 = vmatmul.mubr.f32.gmra.mrb[0].mxu0 %v2249
    %v2317 = vpop.f32.mrb[0].mxu0
    %v2318 = vadd.f32 %v2247, %v2317
    %v2319 = vpop.f32.mrb[0].mxu0
    %2320 = vdwg.mxu0
    %v2321 = vmax.f32 %v2318, 0.0
    %v2322 = vld [vmem:[#allocation4 + $0x90] sm:$0xff]
    %v2323 = vld [vmem:[#allocation4 + $0x98] sm:$0x1]
    %v2324 = vlaneseq
    %v2325 = vshrl.u32 %v2324, 7
    %v2326 = vsub.s32 0, %v2325
    %v2327 = vrot.slane %v2323, %v2326
    %vm2328 = vcmask 64512
    %v2330 = vsel %vm2328, %v2321, 0
    %2332 = vmatprep.subr.mxu0 0.0
    %2333 = vmatpush1.msra.mxu0 %v2322
    %2334 = vmatprep.subr.mxu0 0.0
    %2335 = vmatpush1.msra.mxu0 0.0
    %2336 = vmatprep.subr.mxu0 0.0
    %2337 = vmatpush1.msra.mxu0 0.0
    %2338 = vmatprep.subr.mxu0 0.0
    %2339 = vmatpush1.msra.mxu0 0.0
    %2340 = vmatprep.subr.mxu0 0.0
    %2341 = vmatpush1.msra.mxu0 0.0
    %2342 = vmatprep.subr.mxu0 0.0
    %2343 = vmatpush1.msra.mxu0 0.0
    %2344 = vmatprep.subr.mxu0 0.0
    %2345 = vmatpush1.msra.mxu0 0.0
    %2346 = vmatprep.subr.mxu0 0.0
    %2347 = vmatpush1.msra.mxu0 0.0
    %2348 = vmatprep.subr.mxu0 0.0
    %2349 = vmatpush1.msra.mxu0 0.0
    %2350 = vmatprep.subr.mxu0 0.0
    %2351 = vmatpush1.msra.mxu0 0.0
    %2352 = vmatprep.subr.mxu0 0.0
    %2353 = vmatpush1.msra.mxu0 0.0
    %2354 = vmatprep.subr.mxu0 0.0
    %2355 = vmatpush1.msra.mxu0 0.0
    %2356 = vmatprep.subr.mxu0 0.0
    %2357 = vmatpush1.msra.mxu0 0.0
    %2358 = vmatprep.subr.mxu0 0.0
    %2359 = vmatpush1.msra.mxu0 0.0
    %2360 = vmatprep.subr.mxu0 0.0
    %2361 = vmatpush1.msra.mxu0 0.0
    %2362 = vmatprep.subr.mxu0 0.0
    %2363 = vmatpush1.msra.mxu0 0.0
    %2364 = vmatprep.subr.mxu0 0.0
    %2365 = vmatpush1.msra.mxu0 0.0
    %2366 = vmatprep.subr.mxu0 0.0
    %2367 = vmatpush1.msra.mxu0 0.0
    %2368 = vmatprep.subr.mxu0 0.0
    %2369 = vmatpush1.msra.mxu0 0.0
    %2370 = vmatprep.subr.mxu0 0.0
    %2371 = vmatpush1.msra.mxu0 0.0
    %2372 = vmatprep.subr.mxu0 0.0
    %2373 = vmatpush1.msra.mxu0 0.0
    %2374 = vmatprep.subr.mxu0 0.0
    %2375 = vmatpush1.msra.mxu0 0.0
    %2376 = vmatprep.subr.mxu0 0.0
    %2377 = vmatpush1.msra.mxu0 0.0
    %2378 = vmatprep.subr.mxu0 0.0
    %2379 = vmatpush1.msra.mxu0 0.0
    %2380 = vmatprep.subr.mxu0 0.0
    %2381 = vmatpush1.msra.mxu0 0.0
    %2382 = vmatprep.subr.mxu0 0.0
    %2383 = vmatpush1.msra.mxu0 0.0
    %2384 = vmatprep.subr.mxu0 0.0
    %2385 = vmatpush1.msra.mxu0 0.0
    %2386 = vmatprep.subr.mxu0 0.0
    %2387 = vmatpush1.msra.mxu0 0.0
    %2388 = vmatprep.subr.mxu0 0.0
    %2389 = vmatpush1.msra.mxu0 0.0
    %2390 = vmatprep.subr.mxu0 0.0
    %2391 = vmatpush1.msra.mxu0 0.0
    %2392 = vmatprep.subr.mxu0 0.0
    %2393 = vmatpush1.msra.mxu0 0.0
    %2394 = vmatprep.subr.mxu0 0.0
    %2395 = vmatpush1.msra.mxu0 0.0
    %2396 = vmatprep.mubr.f32.mxu0 0.0
    %2397 = vmatmul.mubr.f32.gmra.mrb[0].mxu0 %v2330
    %v2398 = vpop.f32.mrb[0].mxu0
    %v2399 = vadd.f32 %v2327, %v2398
    %v2400 = vpop.f32.mrb[0].mxu0
    %2401 = vdwg.mxu0
    %v2402 = vxor.u32 %v2399, 2147483648
    %v2403 = vmul.f32 %v2402, 1.442695
    %v2404 = vpow.pop %v2403
    %v2405 = vadd.f32 %v2404, 1.0
    %v2406 = vrcp.pop %v2405
    %v2407 = vmul.f32 1.0, %v2406
    %vm2408 = vcmask 1024
    %2409 = vst.msk [vmem:[%s3] sm:$0x3] %vm2408, %v2407
    // Predicated region
    $region22: #{forward.1} parent=1 // pred_check
      _
    $region23: #{forward.1} parent=1 // pred_check_branch
      %2411 = sbr.rel (0) target = $region25
    $region24: #{forward.1} parent=1 // pred_region
      _
    $region25: #{forward.1} parent=1 // pred_fallthru
      _
    // Predicated region
    $region26: #{forward.1} parent=1 // pred_check
      _
    $region27: #{forward.1} parent=1 // pred_check_branch
      %2413 = sbr.rel (0) target = $region29
    $region28: #{forward.1} parent=1 // pred_region
      _
    $region29: #{forward.1} parent=1 // pred_fallthru
      _
    %2414 = vsyncpa [#allocation3], 1
    %2415 = vsyncpa [#allocation5], 1

</llo_original>
